<compile_context>
chip_gen: v6e
topology: v6e:2x2x1
jax: 0.10.0
libtpu: 0.0.40
codegen_flags: <defaults>
</compile_context>

<pallas_src>
import functools

import jax
import jax.numpy as jnp
from jax.experimental import pallas as pl
from jax.experimental.pallas import tpu as pltpu

NUM_CLASSES = 1000
CLS_PAD = 1024  # lane-dense classifier output (1000 -> 1024, sliced afterwards)


# ----------------------------- tiling helpers ------------------------------

def _round_up(x, m):
    return ((x + m - 1) // m) * m


def _pick_chan_tile(total, target=512):
    """Largest divisor of `total` <= target that is a multiple of 128, else total."""
    if total <= target:
        return total
    for d in range(target, 127, -1):
        if total % d == 0 and d % 128 == 0:
            return d
    return total


def _pick_row_tile(total, target=512):
    """Largest divisor of `total` <= target that is a multiple of 8, else total."""
    if total <= target:
        return total
    for d in range(target, 7, -1):
        if total % d == 0 and d % 8 == 0:
            return d
    return total


# --------------------- fused expansion + depthwise (s1) --------------------

@functools.partial(jax.jit, static_argnames=("H", "W"))
def fused_expand_dw_s1(x, exp_w, exp_s, exp_b, dw_w, dw_s, dw_b, *, H, W):
    """[1x1 conv + BN + SiLU] fused with [depthwise 3x3, stride 1, pad 1 + BN + SiLU].

    x: (N, H*W, Cin) bf16.  Returns:
      y    (N, H*W, Cexp) bf16  -- depthwise output (expanded act never hits HBM)
      psum (N, 8,   Cexp) f32   -- per-(sample, channel) spatial sums for SE.
    Grid: (N, Cexp-channel-tiles), both parallel.  The depthwise runs in the
    flattened (HW, ct) domain using a zero-padded VMEM row buffer, 9 statically
    offset slices and two row-edge masks (no in-kernel reshapes)."""
    N, HW, Cin = x.shape
    Cexp = exp_w.shape[1]
    ct = _pick_chan_tile(Cexp, 512 if HW <= 1024 else 256)
    pad = W + 1

    # row-edge masks in output-flat space: left taps invalid at w==0, right at w==W-1
    col = jnp.arange(HW, dtype=jnp.int32) % W
    mask_l = (col != 0).astype(jnp.float32).reshape(HW, 1)
    mask_r = (col != W - 1).astype(jnp.float32).reshape(HW, 1)

    def kernel(x_ref, ew_ref, es_ref, eb_ref, dw_ref, ds_ref, db_ref,
               ml_ref, mr_ref, y_ref, ps_ref, buf):
        # expansion 1x1 conv (MXU, bf16 in / f32 acc) + folded BN + SiLU
        e = jnp.dot(x_ref[0], ew_ref[...], preferred_element_type=jnp.float32)
        e = e * es_ref[...] + eb_ref[...]
        e = e * jax.nn.sigmoid(e)                                  # SiLU, f32

        # zero only the (W+1)-row pad regions, then write the interior
        buf[0:pad, :] = jnp.zeros((pad, ct), jnp.float32)
        buf[pad + HW:pad + HW + pad, :] = jnp.zeros((pad, ct), jnp.float32)
        buf[pad:pad + HW, :] = e

        def tap(kh, kw):                                           # value at (h+kh-1, w+kw-1)
            s = kh * W + kw
            return buf[s:s + HW, :]

        def wk(k):
            return dw_ref[k:k + 1, :]

        acc_l = tap(0, 0) * wk(0) + tap(1, 0) * wk(3) + tap(2, 0) * wk(6)
        acc_c = tap(0, 1) * wk(1) + tap(1, 1) * wk(4) + tap(2, 1) * wk(7)
        acc_r = tap(0, 2) * wk(2) + tap(1, 2) * wk(5) + tap(2, 2) * wk(8)
        acc = ml_ref[...] * acc_l + acc_c + mr_ref[...] * acc_r

        y = acc * ds_ref[...] + db_ref[...]
        y = y * jax.nn.sigmoid(y)                                  # SiLU
        y_ref[0] = y.astype(y_ref.dtype)
        ps = jnp.sum(y, axis=0, keepdims=True)                     # (1, ct) spatial sum
        ps_ref[0] = jnp.broadcast_to(ps, (8, ct))

    return pl.pallas_call(
        kernel,
        out_shape=(jax.ShapeDtypeStruct((N, HW, Cexp), jnp.bfloat16),
                   jax.ShapeDtypeStruct((N, 8, Cexp), jnp.float32)),
        grid=(N, Cexp // ct),
        in_specs=[pl.BlockSpec((1, HW, Cin), lambda n, c: (n, 0, 0)),
                  pl.BlockSpec((Cin, ct), lambda n, c: (0, c)),
                  pl.BlockSpec((1, ct), lambda n, c: (0, c)),
                  pl.BlockSpec((1, ct), lambda n, c: (0, c)),
                  pl.BlockSpec((9, ct), lambda n, c: (0, c)),
                  pl.BlockSpec((1, ct), lambda n, c: (0, c)),
                  pl.BlockSpec((1, ct), lambda n, c: (0, c)),
                  pl.BlockSpec((HW, 1), lambda n, c: (0, 0)),
                  pl.BlockSpec((HW, 1), lambda n, c: (0, 0))],
        out_specs=(pl.BlockSpec((1, HW, ct), lambda n, c: (n, 0, c)),
                   pl.BlockSpec((1, 8, ct), lambda n, c: (n, 0, c))),
        scratch_shapes=[pltpu.VMEM((HW + 2 * W + 2, ct), jnp.float32)],
        compiler_params=pltpu.CompilerParams(
            dimension_semantics=("parallel", "parallel")),
    )(x, exp_w, exp_s.reshape(1, -1), exp_b.reshape(1, -1),
      dw_w, dw_s.reshape(1, -1), dw_b.reshape(1, -1), mask_l, mask_r)


# --------------------- fused expansion + depthwise (s2) --------------------

@functools.partial(jax.jit, static_argnames=("H", "W"))
def fused_expand_dw_s2(x, exp_w, exp_s, exp_b, dw_w, dw_s, dw_b, *, H, W):
    """[1x1 conv + BN + SiLU] fused with [depthwise 3x3, stride 2, pad 1 + BN + SiLU].

    The *input* x (small) is split into its 4 row/col parity phases in the
    wrapper (bf16, view-level XLA ops); the kernel expands each phase on the
    MXU and combines the 9 depthwise taps with shifted VMEM buffers + masks.
    The expanded activation never touches HBM."""
    N, HW, Cin = x.shape
    Cexp = exp_w.shape[1]
    x4 = x.reshape(N, H, W, Cin)
    if H % 2:                                # pad to even: equivalent output (zero pad)
        x4 = jnp.pad(x4, ((0, 0), (0, 1), (0, 0), (0, 0)))
        H += 1
    if W % 2:
        x4 = jnp.pad(x4, ((0, 0), (0, 0), (0, 1), (0, 0)))
        W += 1
    Ho, Wo = H // 2, W // 2
    M = Ho * Wo
    ct = _pick_chan_tile(Cexp, 512 if M <= 1024 else 256)

    p00 = x4[:, 0::2, 0::2, :].reshape(N, M, Cin)   # even rows, even cols
    p01 = x4[:, 0::2, 1::2, :].reshape(N, M, Cin)   # even rows, odd cols
    p10 = x4[:, 1::2, 0::2, :].reshape(N, M, Cin)   # odd rows, even cols
    p11 = x4[:, 1::2, 1::2, :].reshape(N, M, Cin)   # odd rows, odd cols

    q = jnp.arange(M, dtype=jnp.int32)
    mask_l = (q % Wo != 0).astype(jnp.float32).reshape(M, 1)   # ow == 0 -> left pad
    mask_t = (q >= Wo).astype(jnp.float32).reshape(M, 1)       # oh == 0 -> top pad

    def kernel(p00_ref, p01_ref, p10_ref, p11_ref, ew_ref, es_ref, eb_ref,
               dw_ref, ds_ref, db_ref, ml_ref, mt_ref, y_ref, ps_ref,
               b01, b10, b11):
        def expand(ref):
            e = jnp.dot(ref[0], ew_ref[...], preferred_element_type=jnp.float32)
            e = e * es_ref[...] + eb_ref[...]
            return e * jax.nn.sigmoid(e)                           # SiLU, f32

        y00 = expand(p00_ref)
        y01 = expand(p01_ref)
        y10 = expand(p10_ref)
        y11 = expand(p11_ref)

        # shifted copies via zero-padded VMEM buffers (only thin pad zeroed)
        b01[0:1, :] = jnp.zeros((1, ct), jnp.float32)
        b01[1:1 + M, :] = y01
        b10[0:Wo, :] = jnp.zeros((Wo, ct), jnp.float32)
        b10[Wo:Wo + M, :] = y10
        b11[0:Wo + 1, :] = jnp.zeros((Wo + 1, ct), jnp.float32)
        b11[Wo + 1:Wo + 1 + M, :] = y11

        def wk(k):
            return dw_ref[k:k + 1, :]

        ml = ml_ref[...]
        mt = mt_ref[...]
        acc = (y00 * wk(4) + y01 * wk(5) + y10 * wk(7) + y11 * wk(8)
               + ml * (b01[0:M, :] * wk(3) + b11[Wo:Wo + M, :] * wk(6))
               + mt * (b10[0:M, :] * wk(1) + b11[1:1 + M, :] * wk(2))
               + (ml * mt) * (b11[0:M, :] * wk(0)))

        y = acc * ds_ref[...] + db_ref[...]
        y = y * jax.nn.sigmoid(y)                                  # SiLU
        y_ref[0] = y.astype(y_ref.dtype)
        ps = jnp.sum(y, axis=0, keepdims=True)
        ps_ref[0] = jnp.broadcast_to(ps, (8, ct))

    phase_spec = pl.BlockSpec((1, M, Cin), lambda n, c: (n, 0, 0))
    return pl.pallas_call(
        kernel,
        out_shape=(jax.ShapeDtypeStruct((N, M, Cexp), jnp.bfloat16),
                   jax.ShapeDtypeStruct((N, 8, Cexp), jnp.float32)),
        grid=(N, Cexp // ct),
        in_specs=[phase_spec, phase_spec, phase_spec, phase_spec,
                  pl.BlockSpec((Cin, ct), lambda n, c: (0, c)),
                  pl.BlockSpec((1, ct), lambda n, c: (0, c)),
                  pl.BlockSpec((1, ct), lambda n, c: (0, c)),
                  pl.BlockSpec((9, ct), lambda n, c: (0, c)),
                  pl.BlockSpec((1, ct), lambda n, c: (0, c)),
                  pl.BlockSpec((1, ct), lambda n, c: (0, c)),
                  pl.BlockSpec((M, 1), lambda n, c: (0, 0)),
                  pl.BlockSpec((M, 1), lambda n, c: (0, 0))],
        out_specs=(pl.BlockSpec((1, M, ct), lambda n, c: (n, 0, c)),
                   pl.BlockSpec((1, 8, ct), lambda n, c: (n, 0, c))),
        scratch_shapes=[pltpu.VMEM((M + 1, ct), jnp.float32),
                        pltpu.VMEM((M + Wo, ct), jnp.float32),
                        pltpu.VMEM((M + Wo + 1, ct), jnp.float32)],
        compiler_params=pltpu.CompilerParams(
            dimension_semantics=("parallel", "parallel")),
    )(p00, p01, p10, p11, exp_w, exp_s.reshape(1, -1), exp_b.reshape(1, -1),
      dw_w, dw_s.reshape(1, -1), dw_b.reshape(1, -1), mask_l, mask_t)


# ------------- projection 1x1 conv with fused SE gate (+residual) ----------

@functools.partial(jax.jit, static_argnames=("inv_hw",))
def proj_se_conv(x3, psum, se_w1, se_b1, se_w2, se_b2,
                 proj_w, proj_s, proj_b, residual, *, inv_hw):
    """SqueezeExcitation gate (from precomputed spatial sums) + gated projection
    1x1 conv + folded BN (+ residual).  Grid: (N, HW-row-tiles), both parallel."""
    N, HW, Cexp = x3.shape
    Cout = proj_w.shape[1]
    S = se_w1.shape[1]
    use_res = residual is not None
    tm = _pick_row_tile(HW)

    def kernel(*refs):
        (x_ref, ps_ref, w1_ref, b1_ref, w2_ref, b2_ref,
         pw_ref, s_ref, b_ref) = refs[:9]
        idx = 9
        if use_res:
            r_ref = refs[idx]
            idx += 1
        o_ref = refs[idx]

        # SE gate (tiny: M=1 matmuls), recomputed per grid step
        pooled = jnp.sum(ps_ref[0], axis=0, keepdims=True) * (inv_hw / 8.0)  # (1, Cexp)
        h = jnp.dot(pooled, w1_ref[...],
                    preferred_element_type=jnp.float32) + b1_ref[...]
        h = h * jax.nn.sigmoid(h)                                  # SiLU
        g = jax.nn.sigmoid(jnp.dot(h, w2_ref[...],
                                   preferred_element_type=jnp.float32)
                           + b2_ref[...])                          # (1, Cexp)

        xg = (x_ref[0].astype(jnp.float32) * g).astype(jnp.bfloat16)
        y = jnp.dot(xg, pw_ref[...], preferred_element_type=jnp.float32)
        y = y * s_ref[...] + b_ref[...]                            # folded BN, no act
        if use_res:
            y = y + r_ref[0].astype(jnp.float32)                   # eval StochasticDepth = id
        o_ref[0] = y.astype(o_ref.dtype)

    in_specs = [pl.BlockSpec((1, tm, Cexp), lambda n, m: (n, m, 0)),
                pl.BlockSpec((1, 8, Cexp), lambda n, m: (n, 0, 0)),
                pl.BlockSpec((Cexp, S), lambda n, m: (0, 0)),
                pl.BlockSpec((1, S), lambda n, m: (0, 0)),
                pl.BlockSpec((S, Cexp), lambda n, m: (0, 0)),
                pl.BlockSpec((1, Cexp), lambda n, m: (0, 0)),
                pl.BlockSpec((Cexp, Cout), lambda n, m: (0, 0)),
                pl.BlockSpec((1, Cout), lambda n, m: (0, 0)),
                pl.BlockSpec((1, Cout), lambda n, m: (0, 0))]
    args = [x3, psum, se_w1, se_b1.reshape(1, -1), se_w2, se_b2.reshape(1, -1),
            proj_w, proj_s.reshape(1, -1), proj_b.reshape(1, -1)]
    if use_res:
        in_specs.append(pl.BlockSpec((1, tm, Cout), lambda n, m: (n, m, 0)))
        args.append(residual)

    return pl.pallas_call(
        kernel,
        out_shape=jax.ShapeDtypeStruct((N, HW, Cout), jnp.bfloat16),
        grid=(N, HW // tm),
        in_specs=in_specs,
        out_specs=pl.BlockSpec((1, tm, Cout), lambda n, m: (n, m, 0)),
        compiler_params=pltpu.CompilerParams(
            dimension_semantics=("parallel", "parallel")),
    )(*args)


# ------------------------- final 1x1 conv (flattened) ----------------------

@jax.jit
def pointwise_conv_flat(x2, w, scale, bias):
    """1x1 conv + folded BN + SiLU over flattened (N*HW, Cin) rows.
    Rows are padded to a multiple of the 256-row MXU tile and sliced after."""
    M, Cin = x2.shape
    Cout = w.shape[1]
    tm = min(256, _round_up(M, 8))
    Mp = _round_up(M, tm)
    if Mp != M:
        x2 = jnp.pad(x2, ((0, Mp - M), (0, 0)))

    def kernel(x_ref, w_ref, s_ref, b_ref, o_ref):
        y = jnp.dot(x_ref[...], w_ref[...], preferred_element_type=jnp.float32)
        y = y * s_ref[...] + b_ref[...]
        y = y * jax.nn.sigmoid(y)                                  # SiLU
        o_ref[...] = y.astype(o_ref.dtype)

    out = pl.pallas_call(
        kernel,
        out_shape=jax.ShapeDtypeStruct((Mp, Cout), jnp.bfloat16),
        grid=(Mp // tm,),
        in_specs=[pl.BlockSpec((tm, Cin), lambda i: (i, 0)),
                  pl.BlockSpec((Cin, Cout), lambda i: (0, 0)),
                  pl.BlockSpec((1, Cout), lambda i: (0, 0)),
                  pl.BlockSpec((1, Cout), lambda i: (0, 0))],
        out_specs=pl.BlockSpec((tm, Cout), lambda i: (i, 0)),
        compiler_params=pltpu.CompilerParams(
            dimension_semantics=("parallel",)),
    )(x2, w, scale.reshape(1, -1), bias.reshape(1, -1))
    return out[:M] if Mp != M else out


# ----------------------- avgpool + flatten + classifier ---------------------

@jax.jit
def avgpool_classifier(x3, w, b):
    """AdaptiveAvgPool2d(1) + Flatten + Dropout(eval=id) + Linear.
    Single grid step; pooled activations and weights kept in f32 for parity."""
    N, HW, C = x3.shape
    Cout = w.shape[1]                      # CLS_PAD (lane-dense), sliced by caller
    inv_hw = 1.0 / HW

    def kernel(x_ref, w_ref, b_ref, o_ref):
        pooled = jnp.sum(x_ref[...].astype(jnp.float32), axis=1) * inv_hw  # (N, C)
        o_ref[...] = jnp.dot(pooled, w_ref[...],
                             preferred_element_type=jnp.float32) + b_ref[...]

    return pl.pallas_call(
        kernel,
        out_shape=jax.ShapeDtypeStruct((N, Cout), jnp.float32),
        grid=(1,),
        in_specs=[pl.BlockSpec((N, HW, C), lambda i: (0, 0, 0)),
                  pl.BlockSpec((C, Cout), lambda i: (0, 0)),
                  pl.BlockSpec((1, Cout), lambda i: (0, 0))],
        out_specs=pl.BlockSpec((N, Cout), lambda i: (0, 0)),
        compiler_params=pltpu.CompilerParams(
            dimension_semantics=("arbitrary",)),
    )(x3, w, b.reshape(1, -1))


# ----------------------------- model glue ----------------------------------

STAGE_CFG = [
    # (in_c, out_c, expand_ratio, first_stride, num_blocks) — EffNetV2-S stages 4..6
    (64, 128, 4, 2, 6),
    (128, 160, 6, 1, 9),
    (160, 256, 6, 2, 15),
]


def mbconv_block(x, H, W, p, stride):
    """x: (N, H*W, Cin) bf16 -> (y, Ho, Wo) with y: (N, Ho*Wo, Cout) bf16."""
    Cin = x.shape[2]
    Cout = p["proj_w"].shape[1]
    use_res = (stride == 1 and Cin == Cout)

    if stride == 1:
        h, psum = fused_expand_dw_s1(x, p["exp_w"], p["exp_s"], p["exp_b"],
                                     p["dw_w"], p["dw_s"], p["dw_b"], H=H, W=W)
        Ho, Wo = H, W
    else:
        h, psum = fused_expand_dw_s2(x, p["exp_w"], p["exp_s"], p["exp_b"],
                                     p["dw_w"], p["dw_s"], p["dw_b"], H=H, W=W)
        Ho, Wo = (H + (H % 2)) // 2, (W + (W % 2)) // 2

    res = x if use_res else None
    y = proj_se_conv(h, psum, p["se_w1"], p["se_b1"], p["se_w2"], p["se_b2"],
                     p["proj_w"], p["proj_s"], p["proj_b"], res,
                     inv_hw=1.0 / float(Ho * Wo))
    return y, Ho, Wo


def efficientnet_conv4_forward(x_nchw, params):
    N, C, H, W = x_nchw.shape
    x = jnp.transpose(x_nchw, (0, 2, 3, 1)).astype(jnp.bfloat16)
    x = x.reshape(N, H * W, C)                               # (N, HW, C), C on lanes
    for stage in params["stages"]:
        for blk in stage["blocks"]:
            x, H, W = mbconv_block(x, H, W, blk, blk["stride"])
    C = x.shape[2]
    x3 = pointwise_conv_flat(x.reshape(N * H * W, C),
                             params["final_w"], params["final_s"], params["final_b"])
    x3 = x3.reshape(N, H * W, -1)
    logits = avgpool_classifier(x3, params["cls_w"], params["cls_b"])
    return logits[:, :NUM_CLASSES]


def init_params(key):
    cnt = [0]

    def nk():
        cnt[0] += 1
        return jax.random.fold_in(key, cnt[0])

    def wmat(cin, cout, dtype=jnp.bfloat16):
        w = jax.random.normal(nk(), (cin, cout), jnp.float32) * (0.5 / (cin ** 0.5))
        return w.astype(dtype)

    def bn(c):
        # eval-mode BatchNorm folded to per-channel scale/bias (kept in f32)
        return jnp.ones((c,), jnp.float32), jnp.zeros((c,), jnp.float32)

    stages = []
    for (in_c, out_c, expand, first_stride, n_blocks) in STAGE_CFG:
        blocks = []
        for i in range(n_blocks):
            cin = in_c if i == 0 else out_c
            stride = first_stride if i == 0 else 1
            cexp = cin * expand
            cexp_p = _round_up(cexp, 128)        # lane-align (960 -> 1024); inert padding
            cpad = cexp_p - cexp
            csq = max(1, cin // 4)               # torchvision: squeeze = input_channels // 4
            exp_s, exp_b = bn(cexp_p)            # padded chans: scale 1, bias 0 -> SiLU(0)=0
            dw_s, dw_b = bn(cexp_p)
            proj_s, proj_b = bn(out_c)
            blocks.append(dict(
                stride=stride,
                exp_w=jnp.pad(wmat(cin, cexp), ((0, 0), (0, cpad))),
                exp_s=exp_s, exp_b=exp_b,
                dw_w=jnp.pad(jax.random.normal(nk(), (9, cexp), jnp.float32) * (0.5 / 3.0),
                             ((0, 0), (0, cpad))),
                dw_s=dw_s, dw_b=dw_b,
                se_w1=jnp.pad(wmat(cexp, csq, jnp.float32), ((0, cpad), (0, 0))),
                se_b1=jnp.zeros((csq,), jnp.float32),
                se_w2=jnp.pad(wmat(csq, cexp, jnp.float32), ((0, 0), (0, cpad))),
                se_b2=jnp.zeros((cexp_p,), jnp.float32),
                proj_w=jnp.pad(wmat(cexp, out_c), ((0, cpad), (0, 0))),
                proj_s=proj_s, proj_b=proj_b,
            ))
        stages.append(dict(blocks=blocks))

    fin_s, fin_b = bn(1280)
    cls_w = jax.random.normal(nk(), (1280, NUM_CLASSES), jnp.float32) * (0.5 / (1280 ** 0.5))
    cls_w = jnp.pad(cls_w, ((0, 0), (0, CLS_PAD - NUM_CLASSES)))   # f32, lane-padded
    cls_b = jnp.zeros((CLS_PAD,), jnp.float32)
    return dict(
        stages=stages,
        final_w=wmat(256, 1280), final_s=fin_s, final_b=fin_b,
        cls_w=cls_w, cls_b=cls_b,
    )


if __name__ == "__main__":
    root = jax.random.PRNGKey(0)
    params = init_params(jax.random.fold_in(root, 1))
    # Input to features[4:] of EfficientNetV2-S: 64 channels (output of stage 3);
    # small batch/spatial for the demo run.
    x = jax.random.normal(jax.random.fold_in(root, 2), (2, 64, 8, 8), jnp.float32)
    out = efficientnet_conv4_forward(x, params)
    out = jax.block_until_ready(out)
    assert out.shape == (2, NUM_CLASSES), out.shape
    assert bool(jnp.all(jnp.isfinite(out)))
    print("KERNEL_OK")
</pallas_src>

<mosaic_0001>
module attributes {stable_mosaic.version = 11 : i64} {
  func.func @kernel(%arg0: i32, %arg1: i32, %arg2: memref<1x16x64xbf16, #tpu.memory_space<vmem>>, %arg3: memref<1x16x64xbf16, #tpu.memory_space<vmem>>, %arg4: memref<1x16x64xbf16, #tpu.memory_space<vmem>>, %arg5: memref<1x16x64xbf16, #tpu.memory_space<vmem>>, %arg6: memref<64x256xbf16, #tpu.memory_space<vmem>>, %arg7: memref<1x256xf32, #tpu.memory_space<vmem>>, %arg8: memref<1x256xf32, #tpu.memory_space<vmem>>, %arg9: memref<9x256xf32, #tpu.memory_space<vmem>>, %arg10: memref<1x256xf32, #tpu.memory_space<vmem>>, %arg11: memref<1x256xf32, #tpu.memory_space<vmem>>, %arg12: memref<16x1xf32, #tpu.memory_space<vmem>>, %arg13: memref<16x1xf32, #tpu.memory_space<vmem>>, %arg14: memref<1x16x256xbf16, #tpu.memory_space<vmem>>, %arg15: memref<1x8x256xf32, #tpu.memory_space<vmem>>, %arg16: memref<17x256xf32, #tpu.memory_space<vmem>>, %arg17: memref<20x256xf32, #tpu.memory_space<vmem>>, %arg18: memref<21x256xf32, #tpu.memory_space<vmem>>) attributes {dimension_semantics = [#tpu.dimension_semantics<parallel>, #tpu.dimension_semantics<parallel>], iteration_bounds = array<i64: 2, 1>, scalar_prefetch = 0 : i64, scratch_operands = 3 : i64, tpu.core_type = #tpu.core_type<tc>, window_params = [{transform_indices = @transform_0, window_bounds = array<i64: 1, 16, 64>}, {transform_indices = @transform_1, window_bounds = array<i64: 1, 16, 64>}, {transform_indices = @transform_2, window_bounds = array<i64: 1, 16, 64>}, {transform_indices = @transform_3, window_bounds = array<i64: 1, 16, 64>}, {transform_indices = @transform_4, window_bounds = array<i64: 64, 256>}, {transform_indices = @transform_5, window_bounds = array<i64: 1, 256>}, {transform_indices = @transform_6, window_bounds = array<i64: 1, 256>}, {transform_indices = @transform_7, window_bounds = array<i64: 9, 256>}, {transform_indices = @transform_8, window_bounds = array<i64: 1, 256>}, {transform_indices = @transform_9, window_bounds = array<i64: 1, 256>}, {pipeline_mode = #tpu.pipeline_mode<synchronous>, transform_indices = @transform_10, window_bounds = array<i64: 16, 1>}, {pipeline_mode = #tpu.pipeline_mode<synchronous>, transform_indices = @transform_11, window_bounds = array<i64: 16, 1>}, {transform_indices = @transform_12, window_bounds = array<i64: 1, 16, 256>}, {transform_indices = @transform_13, window_bounds = array<i64: 1, 8, 256>}]} {
    %c0 = arith.constant 0 : index
    %c0_0 = arith.constant 0 : index
    %c0_1 = arith.constant 0 : index
    %0 = vector.load %arg2[%c0, %c0_0, %c0_1] : memref<1x16x64xbf16, #tpu.memory_space<vmem>>, vector<1x16x64xbf16>
    %1 = vector.shape_cast %0 : vector<1x16x64xbf16> to vector<16x64xbf16>
    %c0_2 = arith.constant 0 : index
    %c0_3 = arith.constant 0 : index
    %2 = vector.load %arg6[%c0_2, %c0_3] : memref<64x256xbf16, #tpu.memory_space<vmem>>, vector<64x256xbf16>
    %cst = arith.constant dense<0.000000e+00> : vector<16x256xf32>
    %3 = tpu.matmul %1, %2, %cst {dimension_numbers = #tpu.dot_dimension_numbers<[1], [0], [0], [1], [0, 0, 1, 1], [], []>} : vector<16x64xbf16>, vector<64x256xbf16>, vector<16x256xf32> -> vector<16x256xf32>
    %c0_4 = arith.constant 0 : index
    %c0_5 = arith.constant 0 : index
    %4 = vector.load %arg7[%c0_4, %c0_5] : memref<1x256xf32, #tpu.memory_space<vmem>>, vector<1x256xf32>
    %5 = vector.broadcast %4 : vector<1x256xf32> to vector<16x256xf32>
    %6 = arith.mulf %3, %5 : vector<16x256xf32>
    %c0_6 = arith.constant 0 : index
    %c0_7 = arith.constant 0 : index
    %7 = vector.load %arg8[%c0_6, %c0_7] : memref<1x256xf32, #tpu.memory_space<vmem>>, vector<1x256xf32>
    %8 = vector.broadcast %7 : vector<1x256xf32> to vector<16x256xf32>
    %9 = arith.addf %6, %8 : vector<16x256xf32>
    %10 = arith.negf %9 : vector<16x256xf32>
    %11 = math.exp %10 : vector<16x256xf32>
    %cst_8 = arith.constant 1.000000e+00 : f32
    %12 = vector.broadcast %cst_8 : f32 to vector<16x256xf32>
    %13 = arith.addf %12, %11 : vector<16x256xf32>
    %14 = arith.divf %12, %13 : vector<16x256xf32>
    %15 = arith.mulf %9, %14 : vector<16x256xf32>
    %c0_9 = arith.constant 0 : index
    %c0_10 = arith.constant 0 : index
    %c0_11 = arith.constant 0 : index
    %16 = vector.load %arg3[%c0_9, %c0_10, %c0_11] : memref<1x16x64xbf16, #tpu.memory_space<vmem>>, vector<1x16x64xbf16>
    %17 = vector.shape_cast %16 : vector<1x16x64xbf16> to vector<16x64xbf16>
    %c0_12 = arith.constant 0 : index
    %c0_13 = arith.constant 0 : index
    %18 = vector.load %arg6[%c0_12, %c0_13] : memref<64x256xbf16, #tpu.memory_space<vmem>>, vector<64x256xbf16>
    %cst_14 = arith.constant dense<0.000000e+00> : vector<16x256xf32>
    %19 = tpu.matmul %17, %18, %cst_14 {dimension_numbers = #tpu.dot_dimension_numbers<[1], [0], [0], [1], [0, 0, 1, 1], [], []>} : vector<16x64xbf16>, vector<64x256xbf16>, vector<16x256xf32> -> vector<16x256xf32>
    %c0_15 = arith.constant 0 : index
    %c0_16 = arith.constant 0 : index
    %20 = vector.load %arg7[%c0_15, %c0_16] : memref<1x256xf32, #tpu.memory_space<vmem>>, vector<1x256xf32>
    %21 = vector.broadcast %20 : vector<1x256xf32> to vector<16x256xf32>
    %22 = arith.mulf %19, %21 : vector<16x256xf32>
    %c0_17 = arith.constant 0 : index
    %c0_18 = arith.constant 0 : index
    %23 = vector.load %arg8[%c0_17, %c0_18] : memref<1x256xf32, #tpu.memory_space<vmem>>, vector<1x256xf32>
    %24 = vector.broadcast %23 : vector<1x256xf32> to vector<16x256xf32>
    %25 = arith.addf %22, %24 : vector<16x256xf32>
    %26 = arith.negf %25 : vector<16x256xf32>
    %27 = math.exp %26 : vector<16x256xf32>
    %cst_19 = arith.constant 1.000000e+00 : f32
    %28 = vector.broadcast %cst_19 : f32 to vector<16x256xf32>
    %29 = arith.addf %28, %27 : vector<16x256xf32>
    %30 = arith.divf %28, %29 : vector<16x256xf32>
    %31 = arith.mulf %25, %30 : vector<16x256xf32>
    %c0_20 = arith.constant 0 : index
    %c0_21 = arith.constant 0 : index
    %c0_22 = arith.constant 0 : index
    %32 = vector.load %arg4[%c0_20, %c0_21, %c0_22] : memref<1x16x64xbf16, #tpu.memory_space<vmem>>, vector<1x16x64xbf16>
    %33 = vector.shape_cast %32 : vector<1x16x64xbf16> to vector<16x64xbf16>
    %c0_23 = arith.constant 0 : index
    %c0_24 = arith.constant 0 : index
    %34 = vector.load %arg6[%c0_23, %c0_24] : memref<64x256xbf16, #tpu.memory_space<vmem>>, vector<64x256xbf16>
    %cst_25 = arith.constant dense<0.000000e+00> : vector<16x256xf32>
    %35 = tpu.matmul %33, %34, %cst_25 {dimension_numbers = #tpu.dot_dimension_numbers<[1], [0], [0], [1], [0, 0, 1, 1], [], []>} : vector<16x64xbf16>, vector<64x256xbf16>, vector<16x256xf32> -> vector<16x256xf32>
    %c0_26 = arith.constant 0 : index
    %c0_27 = arith.constant 0 : index
    %36 = vector.load %arg7[%c0_26, %c0_27] : memref<1x256xf32, #tpu.memory_space<vmem>>, vector<1x256xf32>
    %37 = vector.broadcast %36 : vector<1x256xf32> to vector<16x256xf32>
    %38 = arith.mulf %35, %37 : vector<16x256xf32>
    %c0_28 = arith.constant 0 : index
    %c0_29 = arith.constant 0 : index
    %39 = vector.load %arg8[%c0_28, %c0_29] : memref<1x256xf32, #tpu.memory_space<vmem>>, vector<1x256xf32>
    %40 = vector.broadcast %39 : vector<1x256xf32> to vector<16x256xf32>
    %41 = arith.addf %38, %40 : vector<16x256xf32>
    %42 = arith.negf %41 : vector<16x256xf32>
    %43 = math.exp %42 : vector<16x256xf32>
    %cst_30 = arith.constant 1.000000e+00 : f32
    %44 = vector.broadcast %cst_30 : f32 to vector<16x256xf32>
    %45 = arith.addf %44, %43 : vector<16x256xf32>
    %46 = arith.divf %44, %45 : vector<16x256xf32>
    %47 = arith.mulf %41, %46 : vector<16x256xf32>
    %c0_31 = arith.constant 0 : index
    %c0_32 = arith.constant 0 : index
    %c0_33 = arith.constant 0 : index
    %48 = vector.load %arg5[%c0_31, %c0_32, %c0_33] : memref<1x16x64xbf16, #tpu.memory_space<vmem>>, vector<1x16x64xbf16>
    %49 = vector.shape_cast %48 : vector<1x16x64xbf16> to vector<16x64xbf16>
    %c0_34 = arith.constant 0 : index
    %c0_35 = arith.constant 0 : index
    %50 = vector.load %arg6[%c0_34, %c0_35] : memref<64x256xbf16, #tpu.memory_space<vmem>>, vector<64x256xbf16>
    %cst_36 = arith.constant dense<0.000000e+00> : vector<16x256xf32>
    %51 = tpu.matmul %49, %50, %cst_36 {dimension_numbers = #tpu.dot_dimension_numbers<[1], [0], [0], [1], [0, 0, 1, 1], [], []>} : vector<16x64xbf16>, vector<64x256xbf16>, vector<16x256xf32> -> vector<16x256xf32>
    %c0_37 = arith.constant 0 : index
    %c0_38 = arith.constant 0 : index
    %52 = vector.load %arg7[%c0_37, %c0_38] : memref<1x256xf32, #tpu.memory_space<vmem>>, vector<1x256xf32>
    %53 = vector.broadcast %52 : vector<1x256xf32> to vector<16x256xf32>
    %54 = arith.mulf %51, %53 : vector<16x256xf32>
    %c0_39 = arith.constant 0 : index
    %c0_40 = arith.constant 0 : index
    %55 = vector.load %arg8[%c0_39, %c0_40] : memref<1x256xf32, #tpu.memory_space<vmem>>, vector<1x256xf32>
    %56 = vector.broadcast %55 : vector<1x256xf32> to vector<16x256xf32>
    %57 = arith.addf %54, %56 : vector<16x256xf32>
    %58 = arith.negf %57 : vector<16x256xf32>
    %59 = math.exp %58 : vector<16x256xf32>
    %cst_41 = arith.constant 1.000000e+00 : f32
    %60 = vector.broadcast %cst_41 : f32 to vector<16x256xf32>
    %61 = arith.addf %60, %59 : vector<16x256xf32>
    %62 = arith.divf %60, %61 : vector<16x256xf32>
    %63 = arith.mulf %57, %62 : vector<16x256xf32>
    %cst_42 = arith.constant 0.000000e+00 : f32
    %64 = vector.broadcast %cst_42 : f32 to vector<1x256xf32>
    %c0_43 = arith.constant 0 : index
    %c0_44 = arith.constant 0 : index
    %65 = vector.load %arg16[%c0_43, %c0_44] : memref<17x256xf32, #tpu.memory_space<vmem>>, vector<1x256xf32>
    tpu.vector_store %arg16[%c0_43, %c0_44], %64 {strides = array<i32>} : memref<17x256xf32, #tpu.memory_space<vmem>>, vector<1x256xf32>,
    %c1 = arith.constant 1 : index
    %c0_45 = arith.constant 0 : index
    %66 = vector.load %arg16[%c1, %c0_45] : memref<17x256xf32, #tpu.memory_space<vmem>>, vector<16x256xf32>
    tpu.vector_store %arg16[%c1, %c0_45], %31 {strides = array<i32>} : memref<17x256xf32, #tpu.memory_space<vmem>>, vector<16x256xf32>,
    %cst_46 = arith.constant 0.000000e+00 : f32
    %67 = vector.broadcast %cst_46 : f32 to vector<4x256xf32>
    %c0_47 = arith.constant 0 : index
    %c0_48 = arith.constant 0 : index
    %68 = vector.load %arg17[%c0_47, %c0_48] : memref<20x256xf32, #tpu.memory_space<vmem>>, vector<4x256xf32>
    tpu.vector_store %arg17[%c0_47, %c0_48], %67 {strides = array<i32>} : memref<20x256xf32, #tpu.memory_space<vmem>>, vector<4x256xf32>,
    %c4 = arith.constant 4 : index
    %c0_49 = arith.constant 0 : index
    %69 = vector.load %arg17[%c4, %c0_49] : memref<20x256xf32, #tpu.memory_space<vmem>>, vector<16x256xf32>
    tpu.vector_store %arg17[%c4, %c0_49], %47 {strides = array<i32>} : memref<20x256xf32, #tpu.memory_space<vmem>>, vector<16x256xf32>,
    %cst_50 = arith.constant 0.000000e+00 : f32
    %70 = vector.broadcast %cst_50 : f32 to vector<5x256xf32>
    %c0_51 = arith.constant 0 : index
    %c0_52 = arith.constant 0 : index
    %71 = vector.load %arg18[%c0_51, %c0_52] : memref<21x256xf32, #tpu.memory_space<vmem>>, vector<5x256xf32>
    tpu.vector_store %arg18[%c0_51, %c0_52], %70 {strides = array<i32>} : memref<21x256xf32, #tpu.memory_space<vmem>>, vector<5x256xf32>,
    %c5 = arith.constant 5 : index
    %c0_53 = arith.constant 0 : index
    %72 = vector.load %arg18[%c5, %c0_53] : memref<21x256xf32, #tpu.memory_space<vmem>>, vector<16x256xf32>
    tpu.vector_store %arg18[%c5, %c0_53], %63 {strides = array<i32>} : memref<21x256xf32, #tpu.memory_space<vmem>>, vector<16x256xf32>,
    %c0_54 = arith.constant 0 : index
    %c0_55 = arith.constant 0 : index
    %73 = vector.load %arg12[%c0_54, %c0_55] : memref<16x1xf32, #tpu.memory_space<vmem>>, vector<16x1xf32>
    %c0_56 = arith.constant 0 : index
    %c0_57 = arith.constant 0 : index
    %74 = vector.load %arg13[%c0_56, %c0_57] : memref<16x1xf32, #tpu.memory_space<vmem>>, vector<16x1xf32>
    %c4_58 = arith.constant 4 : index
    %c0_59 = arith.constant 0 : index
    %75 = vector.load %arg9[%c4_58, %c0_59] : memref<9x256xf32, #tpu.memory_space<vmem>>, vector<1x256xf32>
    %76 = vector.broadcast %75 : vector<1x256xf32> to vector<16x256xf32>
    %77 = arith.mulf %15, %76 : vector<16x256xf32>
    %c5_60 = arith.constant 5 : index
    %c0_61 = arith.constant 0 : index
    %78 = vector.load %arg9[%c5_60, %c0_61] : memref<9x256xf32, #tpu.memory_space<vmem>>, vector<1x256xf32>
    %79 = vector.broadcast %78 : vector<1x256xf32> to vector<16x256xf32>
    %80 = arith.mulf %31, %79 : vector<16x256xf32>
    %81 = arith.addf %77, %80 : vector<16x256xf32>
    %c7 = arith.constant 7 : index
    %c0_62 = arith.constant 0 : index
    %82 = vector.load %arg9[%c7, %c0_62] : memref<9x256xf32, #tpu.memory_space<vmem>>, vector<1x256xf32>
    %83 = vector.broadcast %82 : vector<1x256xf32> to vector<16x256xf32>
    %84 = arith.mulf %47, %83 : vector<16x256xf32>
    %85 = arith.addf %81, %84 : vector<16x256xf32>
    %c8 = arith.constant 8 : index
    %c0_63 = arith.constant 0 : index
    %86 = vector.load %arg9[%c8, %c0_63] : memref<9x256xf32, #tpu.memory_space<vmem>>, vector<1x256xf32>
    %87 = vector.broadcast %86 : vector<1x256xf32> to vector<16x256xf32>
    %88 = arith.mulf %63, %87 : vector<16x256xf32>
    %89 = arith.addf %85, %88 : vector<16x256xf32>
    %c0_64 = arith.constant 0 : index
    %c0_65 = arith.constant 0 : index
    %90 = vector.load %arg16[%c0_64, %c0_65] : memref<17x256xf32, #tpu.memory_space<vmem>>, vector<16x256xf32>
    %c3 = arith.constant 3 : index
    %c0_66 = arith.constant 0 : index
    %91 = vector.load %arg9[%c3, %c0_66] : memref<9x256xf32, #tpu.memory_space<vmem>>, vector<1x256xf32>
    %92 = vector.broadcast %91 : vector<1x256xf32> to vector<16x256xf32>
    %93 = arith.mulf %90, %92 : vector<16x256xf32>
    %c4_67 = arith.constant 4 : index
    %c0_68 = arith.constant 0 : index
    %94 = vector.load %arg18[%c4_67, %c0_68] : memref<21x256xf32, #tpu.memory_space<vmem>>, vector<16x256xf32>
    %c6 = arith.constant 6 : index
    %c0_69 = arith.constant 0 : index
    %95 = vector.load %arg9[%c6, %c0_69] : memref<9x256xf32, #tpu.memory_space<vmem>>, vector<1x256xf32>
    %96 = vector.broadcast %95 : vector<1x256xf32> to vector<16x256xf32>
    %97 = arith.mulf %94, %96 : vector<16x256xf32>
    %98 = arith.addf %93, %97 : vector<16x256xf32>
    %99 = vector.broadcast %73 : vector<16x1xf32> to vector<16x256xf32>
    %100 = arith.mulf %99, %98 : vector<16x256xf32>
    %101 = arith.addf %89, %100 : vector<16x256xf32>
    %c0_70 = arith.constant 0 : index
    %c0_71 = arith.constant 0 : index
    %102 = vector.load %arg17[%c0_70, %c0_71] : memref<20x256xf32, #tpu.memory_space<vmem>>, vector<16x256xf32>
    %c1_72 = arith.constant 1 : index
    %c0_73 = arith.constant 0 : index
    %103 = vector.load %arg9[%c1_72, %c0_73] : memref<9x256xf32, #tpu.memory_space<vmem>>, vector<1x256xf32>
    %104 = vector.broadcast %103 : vector<1x256xf32> to vector<16x256xf32>
    %105 = arith.mulf %102, %104 : vector<16x256xf32>
    %c1_74 = arith.constant 1 : index
    %c0_75 = arith.constant 0 : index
    %106 = vector.load %arg18[%c1_74, %c0_75] : memref<21x256xf32, #tpu.memory_space<vmem>>, vector<16x256xf32>
    %c2 = arith.constant 2 : index
    %c0_76 = arith.constant 0 : index
    %107 = vector.load %arg9[%c2, %c0_76] : memref<9x256xf32, #tpu.memory_space<vmem>>, vector<1x256xf32>
    %108 = vector.broadcast %107 : vector<1x256xf32> to vector<16x256xf32>
    %109 = arith.mulf %106, %108 : vector<16x256xf32>
    %110 = arith.addf %105, %109 : vector<16x256xf32>
    %111 = vector.broadcast %74 : vector<16x1xf32> to vector<16x256xf32>
    %112 = arith.mulf %111, %110 : vector<16x256xf32>
    %113 = arith.addf %101, %112 : vector<16x256xf32>
    %114 = arith.mulf %73, %74 : vector<16x1xf32>
    %c0_77 = arith.constant 0 : index
    %c0_78 = arith.constant 0 : index
    %115 = vector.load %arg18[%c0_77, %c0_78] : memref<21x256xf32, #tpu.memory_space<vmem>>, vector<16x256xf32>
    %c0_79 = arith.constant 0 : index
    %c0_80 = arith.constant 0 : index
    %116 = vector.load %arg9[%c0_79, %c0_80] : memref<9x256xf32, #tpu.memory_space<vmem>>, vector<1x256xf32>
    %117 = vector.broadcast %116 : vector<1x256xf32> to vector<16x256xf32>
    %118 = arith.mulf %115, %117 : vector<16x256xf32>
    %119 = vector.broadcast %114 : vector<16x1xf32> to vector<16x256xf32>
    %120 = arith.mulf %119, %118 : vector<16x256xf32>
    %121 = arith.addf %113, %120 : vector<16x256xf32>
    %c0_81 = arith.constant 0 : index
    %c0_82 = arith.constant 0 : index
    %122 = vector.load %arg10[%c0_81, %c0_82] : memref<1x256xf32, #tpu.memory_space<vmem>>, vector<1x256xf32>
    %123 = vector.broadcast %122 : vector<1x256xf32> to vector<16x256xf32>
    %124 = arith.mulf %121, %123 : vector<16x256xf32>
    %c0_83 = arith.constant 0 : index
    %c0_84 = arith.constant 0 : index
    %125 = vector.load %arg11[%c0_83, %c0_84] : memref<1x256xf32, #tpu.memory_space<vmem>>, vector<1x256xf32>
    %126 = vector.broadcast %125 : vector<1x256xf32> to vector<16x256xf32>
    %127 = arith.addf %124, %126 : vector<16x256xf32>
    %128 = arith.negf %127 : vector<16x256xf32>
    %129 = math.exp %128 : vector<16x256xf32>
    %cst_85 = arith.constant 1.000000e+00 : f32
    %130 = vector.broadcast %cst_85 : f32 to vector<16x256xf32>
    %131 = arith.addf %130, %129 : vector<16x256xf32>
    %132 = arith.divf %130, %131 : vector<16x256xf32>
    %133 = arith.mulf %127, %132 : vector<16x256xf32>
    %134 = arith.truncf %133 : vector<16x256xf32> to vector<16x256xbf16>
    %c0_86 = arith.constant 0 : index
    %c0_87 = arith.constant 0 : index
    %c0_88 = arith.constant 0 : index
    %135 = vector.load %arg14[%c0_86, %c0_87, %c0_88] : memref<1x16x256xbf16, #tpu.memory_space<vmem>>, vector<1x16x256xbf16>
    %136 = vector.shape_cast %135 : vector<1x16x256xbf16> to vector<16x256xbf16>
    %137 = vector.shape_cast %134 : vector<16x256xbf16> to vector<1x16x256xbf16>
    tpu.vector_store %arg14[%c0_86, %c0_87, %c0_88], %137 {strides = array<i32>} : memref<1x16x256xbf16, #tpu.memory_space<vmem>>, vector<1x16x256xbf16>,
    %cst_89 = arith.constant dense<0.000000e+00> : vector<256xf32>
    %138 = vector.multi_reduction <add>, %133, %cst_89 [0] : vector<16x256xf32> to vector<256xf32>
    %139 = vector.shape_cast %138 : vector<256xf32> to vector<1x256xf32>
    %140 = vector.shape_cast %139 : vector<1x256xf32> to vector<1x256xf32>
    %141 = vector.broadcast %140 : vector<1x256xf32> to vector<8x256xf32>
    %c0_90 = arith.constant 0 : index
    %c0_91 = arith.constant 0 : index
    %c0_92 = arith.constant 0 : index
    %142 = vector.load %arg15[%c0_90, %c0_91, %c0_92] : memref<1x8x256xf32, #tpu.memory_space<vmem>>, vector<1x8x256xf32>
    %143 = vector.shape_cast %142 : vector<1x8x256xf32> to vector<8x256xf32>
    %144 = vector.shape_cast %141 : vector<8x256xf32> to vector<1x8x256xf32>
    tpu.vector_store %arg15[%c0_90, %c0_91, %c0_92], %144 {strides = array<i32>} : memref<1x8x256xf32, #tpu.memory_space<vmem>>, vector<1x8x256xf32>,
    return
  }
  func.func @transform_0(%arg0: i32, %arg1: i32) -> (i32, i32, i32) {
    %c0_i32 = arith.constant 0 : i32
    %c0_i32_0 = arith.constant 0 : i32
    %c0_i32_1 = arith.constant 0 : i32
    return %arg0, %c0_i32, %c0_i32_0 : i32, i32, i32
  }
  func.func @transform_1(%arg0: i32, %arg1: i32) -> (i32, i32, i32) {
    %c0_i32 = arith.constant 0 : i32
    %c0_i32_0 = arith.constant 0 : i32
    %c0_i32_1 = arith.constant 0 : i32
    return %arg0, %c0_i32, %c0_i32_0 : i32, i32, i32
  }
  func.func @transform_2(%arg0: i32, %arg1: i32) -> (i32, i32, i32) {
    %c0_i32 = arith.constant 0 : i32
    %c0_i32_0 = arith.constant 0 : i32
    %c0_i32_1 = arith.constant 0 : i32
    return %arg0, %c0_i32, %c0_i32_0 : i32, i32, i32
  }
  func.func @transform_3(%arg0: i32, %arg1: i32) -> (i32, i32, i32) {
    %c0_i32 = arith.constant 0 : i32
    %c0_i32_0 = arith.constant 0 : i32
    %c0_i32_1 = arith.constant 0 : i32
    return %arg0, %c0_i32, %c0_i32_0 : i32, i32, i32
  }
  func.func @transform_4(%arg0: i32, %arg1: i32) -> (i32, i32) {
    %c0_i32 = arith.constant 0 : i32
    %c0_i32_0 = arith.constant 0 : i32
    return %c0_i32, %arg1 : i32, i32
  }
  func.func @transform_5(%arg0: i32, %arg1: i32) -> (i32, i32) {
    %c0_i32 = arith.constant 0 : i32
    %c0_i32_0 = arith.constant 0 : i32
    return %c0_i32, %arg1 : i32, i32
  }
  func.func @transform_6(%arg0: i32, %arg1: i32) -> (i32, i32) {
    %c0_i32 = arith.constant 0 : i32
    %c0_i32_0 = arith.constant 0 : i32
    return %c0_i32, %arg1 : i32, i32
  }
  func.func @transform_7(%arg0: i32, %arg1: i32) -> (i32, i32) {
    %c0_i32 = arith.constant 0 : i32
    %c0_i32_0 = arith.constant 0 : i32
    return %c0_i32, %arg1 : i32, i32
  }
  func.func @transform_8(%arg0: i32, %arg1: i32) -> (i32, i32) {
    %c0_i32 = arith.constant 0 : i32
    %c0_i32_0 = arith.constant 0 : i32
    return %c0_i32, %arg1 : i32, i32
  }
  func.func @transform_9(%arg0: i32, %arg1: i32) -> (i32, i32) {
    %c0_i32 = arith.constant 0 : i32
    %c0_i32_0 = arith.constant 0 : i32
    return %c0_i32, %arg1 : i32, i32
  }
  func.func @transform_10(%arg0: i32, %arg1: i32) -> (i32, i32) {
    %c0_i32 = arith.constant 0 : i32
    %c0_i32_0 = arith.constant 0 : i32
    %c0_i32_1 = arith.constant 0 : i32
    return %c0_i32, %c0_i32_0 : i32, i32
  }
  func.func @transform_11(%arg0: i32, %arg1: i32) -> (i32, i32) {
    %c0_i32 = arith.constant 0 : i32
    %c0_i32_0 = arith.constant 0 : i32
    %c0_i32_1 = arith.constant 0 : i32
    return %c0_i32, %c0_i32_0 : i32, i32
  }
  func.func @transform_12(%arg0: i32, %arg1: i32) -> (i32, i32, i32) {
    %c0_i32 = arith.constant 0 : i32
    %c0_i32_0 = arith.constant 0 : i32
    return %arg0, %c0_i32, %arg1 : i32, i32, i32
  }
  func.func @transform_13(%arg0: i32, %arg1: i32) -> (i32, i32, i32) {
    %c0_i32 = arith.constant 0 : i32
    %c0_i32_0 = arith.constant 0 : i32
    return %arg0, %c0_i32, %arg1 : i32, i32, i32
  }
}

</mosaic_0001>

<llo_original>
// kernel: fused_expand_dw_s2.1
$region0: #{fused_expand_dw_s2.1}
  #allocation0 [shape = 'u32[]', space=smem, size = 0x4, offset = 0x4, fixed_abs, tag = 'smem constant byte address 0x4 - core index']
  #allocation1 [shape = 'u32[144,128]{1,0:T(1,128)}', space=vmem, size = 0x12000, scoped, tag = 'internal scratch']
  #allocation2 [shape = 'f32[17,256]{1,0:T(8,128)}', space=vmem, size = 0x6000, scoped, tag = 'scratch operand']
  #allocation3 [shape = 'f32[20,256]{1,0:T(8,128)}', space=vmem, size = 0x6000, scoped, tag = 'scratch operand']
  #allocation4 [shape = 'f32[21,256]{1,0:T(8,128)}', space=vmem, size = 0x6000, scoped, tag = 'scratch operand']
  %s0 = inlined_call_operand.vmem [shape: bf16[2,16,64], index: 0, kind: input, shape index: {}]
  %s1 = inlined_call_operand.vmem [shape: bf16[2,16,64], index: 1, kind: input, shape index: {}]
  %s2 = inlined_call_operand.vmem [shape: bf16[2,16,64], index: 2, kind: input, shape index: {}]
  %s3 = inlined_call_operand.vmem [shape: bf16[2,16,64], index: 3, kind: input, shape index: {}]
  %s4 = inlined_call_operand.vmem [shape: bf16[64,256], index: 4, kind: input, shape index: {}]
  %s5 = inlined_call_operand.vmem [shape: f32[1,256], index: 5, kind: input, shape index: {}]
  %s6 = inlined_call_operand.vmem [shape: f32[1,256], index: 6, kind: input, shape index: {}]
  %s7 = inlined_call_operand.vmem [shape: f32[9,256], index: 7, kind: input, shape index: {}]
  %s8 = inlined_call_operand.vmem [shape: f32[1,256], index: 8, kind: input, shape index: {}]
  %s9 = inlined_call_operand.vmem [shape: f32[1,256], index: 9, kind: input, shape index: {}]
  %s10 = inlined_call_operand.vmem [shape: f32[16,1], index: 10, kind: input, shape index: {}]
  %s11 = inlined_call_operand.vmem [shape: f32[16,1], index: 11, kind: input, shape index: {}]
  %s12 = inlined_call_operand.hbm [shape: bf16[2,16,256], index: 12, kind: output, shape index: {0}]
  %s13 = inlined_call_operand.hbm [shape: f32[2,8,256], index: 13, kind: output, shape index: {1}]
  %14 = xla_tuple %s12, %s13
  %s15 = sld [smem:[#allocation0]]
  $region89: #{fused_expand_dw_s2.1} parent=0
    _
  %s17 = ssub.s32 1, %s15
  %s18 = scalar_select 0, %s17, %s15
  $region1: #{fused_expand_dw_s2.1} parent=0
    #allocation5 [shape = 'u8[16384]{0}', space=vmem, size = 0x4000, scoped, tag = 'output window, operand 0']
    #allocation6 [shape = 's32[2]{0}', space=sflag, size = 0x8, scoped, tag = 'scoped memory for fused_expand_dw_s2.1']
    #allocation7 [shape = 'u8[16384]{0}', space=vmem, size = 0x4000, scoped, tag = 'output window, operand 1']
    #allocation8 [shape = 's32[2]{0}', space=sflag, size = 0x8, scoped, tag = 'scoped memory for fused_expand_dw_s2.1']
    %19 = vsyncpa [#allocation6], 0
    %s20 = scalar_lea.sflag [#allocation6], 1
    %21 = vsyncpa %s20, 0
    %22 = vsyncpa [#allocation8], 0
    %s23 = scalar_lea.sflag [#allocation8], 1
    %24 = vsyncpa %s23, 0
    loop: start=0, step=1, limit=4
    $region2: #{fused_expand_dw_s2.1} parent=1 // loop_pre_header
      _
    $region3: #{fused_expand_dw_s2.1} parent=1 // loop_header
      %s26 = sphi 0, %s30
      %p27 = scmp.ge.s32.totalorder %s26, 4
      %s33 = sphi 0, %s45
      %s34 = sphi 0, %s41
      %s35 = sphi 0, %s33
      %s36 = sphi 0, %s34
      %s37 = sphi 0, %s35
      %s38 = sphi 0, %s36
      %s48 = sphi 0, %s50
      %s51 = sphi 0, %s48
      %s52 = sphi 0, %s51
      %s68 = sphi 0, %s52
      %s74 = sphi 0, %s76
      %s77 = sphi 0, %s74
      %s78 = sphi 0, %s77
      %s94 = sphi 0, %s78
      %s100 = sphi 0, %s102
      %s103 = sphi 0, %s100
      %s104 = sphi 0, %s103
      %s120 = sphi 0, %s104
      %s126 = sphi 0, %s128
      %s129 = sphi 0, %s126
      %s130 = sphi 0, %s129
      %s146 = sphi 0, %s130
      %s152 = sphi 0, %s154
      %s155 = sphi 0, %s152
      %s156 = sphi 0, %s155
      %s172 = sphi 0, %s156
      %s178 = sphi 0, %s180
      %s181 = sphi 0, %s178
      %s182 = sphi 0, %s181
      %s198 = sphi 0, %s182
      %s204 = sphi 0, %s206
      %s207 = sphi 0, %s204
      %s208 = sphi 0, %s207
      %s224 = sphi 0, %s208
      %s230 = sphi 0, %s232
      %s233 = sphi 0, %s230
      %s234 = sphi 0, %s233
      %s250 = sphi 0, %s234
      %s256 = sphi 0, %s258
      %s259 = sphi 0, %s256
      %s260 = sphi 0, %s259
      %s276 = sphi 0, %s260
      %s282 = sphi 0, %s284
      %s285 = sphi 0, %s282
      %s286 = sphi 0, %s285
      %s302 = sphi 0, %s286
      %s306 = sphi 0, %s306
      %s308 = sphi 0, %s306
      %s309 = sphi 0, %s308
      %s323 = sphi 0, %s309
      %s327 = sphi 0, %s327
      %s329 = sphi 0, %s327
      %s330 = sphi 0, %s329
      %s344 = sphi 0, %s330
      %s352 = sphi 0, %s354
      %s355 = sphi 0, %s352
      %s356 = sphi 0, %s355
      %s372 = sphi 0, %s356
      %s380 = sphi 0, %s382
      %s383 = sphi 0, %s380
      %s384 = sphi 0, %s383
      %s400 = sphi 0, %s384
    $region4: #{fused_expand_dw_s2.1} parent=1 // loop_header_branch
      %29 = sbr.rel (%p27) target = $region8
    $region5: #{fused_expand_dw_s2.1} parent=1 // loop_body
      %s31 = ssub.s32 %s26, 1
      %s32 = ssub.s32 %s26, 2
      %s39 = sadd.s32 1, %s34
      %p40 = scmp.ge.s32.totalorder %s39, 1
      %s41 = scalar_select %p40, 0, %s39
      %s42 = sadd.s32 1, %s33
      %s43 = scalar_select %p40, %s42, %s33
      %p44 = scmp.ge.s32.totalorder %s43, 2
      %s45 = scalar_select %p44, 0, %s43
      %s46 = ssub.s32 %s33, %s45
      %p47 = scmp.eq.s32.totalorder %s46, 0
      %s49 = sadd.s32 %s48, 1
      %s50 = scalar_select %p47, %s48, %s49
      %p53 = pneg %p47
      %p54 = scmp.eq.s32.totalorder %s26, 1
      %p55 = por %p53, %p54
      %p56 = scmp.ne.s32.totalorder %s48, %s51
      %p57 = scmp.eq.s32.totalorder %s26, 0
      %p58 = por %p56, %p57
      %p59 = scmp.ne.s32.totalorder %s48, %s51
      %p60 = scmp.eq.s32.totalorder %s31, 1
      %p61 = por %p59, %p60
      %p62 = scmp.ne.s32.totalorder %s51, %s52
      %p63 = scmp.eq.s32.totalorder %s31, 0
      %p64 = por %p62, %p63
      %p65 = scmp.ne.s32.totalorder %s51, %s52
      %p66 = scmp.eq.s32.totalorder %s32, 1
      %p67 = por %p65, %p66
      %p69 = scmp.ne.s32.totalorder %s52, %s68
      %p70 = scmp.eq.s32.totalorder %s32, 0
      %p71 = por %p69, %p70
      %s72 = ssub.s32 %s33, %s45
      %p73 = scmp.eq.s32.totalorder %s72, 0
      %s75 = sadd.s32 %s74, 1
      %s76 = scalar_select %p73, %s74, %s75
      %p79 = pneg %p73
      %p80 = scmp.eq.s32.totalorder %s26, 1
      %p81 = por %p79, %p80
      %p82 = scmp.ne.s32.totalorder %s74, %s77
      %p83 = scmp.eq.s32.totalorder %s26, 0
      %p84 = por %p82, %p83
      %p85 = scmp.ne.s32.totalorder %s74, %s77
      %p86 = scmp.eq.s32.totalorder %s31, 1
      %p87 = por %p85, %p86
      %p88 = scmp.ne.s32.totalorder %s77, %s78
      %p89 = scmp.eq.s32.totalorder %s31, 0
      %p90 = por %p88, %p89
      %p91 = scmp.ne.s32.totalorder %s77, %s78
      %p92 = scmp.eq.s32.totalorder %s32, 1
      %p93 = por %p91, %p92
      %p95 = scmp.ne.s32.totalorder %s78, %s94
      %p96 = scmp.eq.s32.totalorder %s32, 0
      %p97 = por %p95, %p96
      %s98 = ssub.s32 %s33, %s45
      %p99 = scmp.eq.s32.totalorder %s98, 0
      %s101 = sadd.s32 %s100, 1
      %s102 = scalar_select %p99, %s100, %s101
      %p105 = pneg %p99
      %p106 = scmp.eq.s32.totalorder %s26, 1
      %p107 = por %p105, %p106
      %p108 = scmp.ne.s32.totalorder %s100, %s103
      %p109 = scmp.eq.s32.totalorder %s26, 0
      %p110 = por %p108, %p109
      %p111 = scmp.ne.s32.totalorder %s100, %s103
      %p112 = scmp.eq.s32.totalorder %s31, 1
      %p113 = por %p111, %p112
      %p114 = scmp.ne.s32.totalorder %s103, %s104
      %p115 = scmp.eq.s32.totalorder %s31, 0
      %p116 = por %p114, %p115
      %p117 = scmp.ne.s32.totalorder %s103, %s104
      %p118 = scmp.eq.s32.totalorder %s32, 1
      %p119 = por %p117, %p118
      %p121 = scmp.ne.s32.totalorder %s104, %s120
      %p122 = scmp.eq.s32.totalorder %s32, 0
      %p123 = por %p121, %p122
      %s124 = ssub.s32 %s33, %s45
      %p125 = scmp.eq.s32.totalorder %s124, 0
      %s127 = sadd.s32 %s126, 1
      %s128 = scalar_select %p125, %s126, %s127
      %p131 = pneg %p125
      %p132 = scmp.eq.s32.totalorder %s26, 1
      %p133 = por %p131, %p132
      %p134 = scmp.ne.s32.totalorder %s126, %s129
      %p135 = scmp.eq.s32.totalorder %s26, 0
      %p136 = por %p134, %p135
      %p137 = scmp.ne.s32.totalorder %s126, %s129
      %p138 = scmp.eq.s32.totalorder %s31, 1
      %p139 = por %p137, %p138
      %p140 = scmp.ne.s32.totalorder %s129, %s130
      %p141 = scmp.eq.s32.totalorder %s31, 0
      %p142 = por %p140, %p141
      %p143 = scmp.ne.s32.totalorder %s129, %s130
      %p144 = scmp.eq.s32.totalorder %s32, 1
      %p145 = por %p143, %p144
      %p147 = scmp.ne.s32.totalorder %s130, %s146
      %p148 = scmp.eq.s32.totalorder %s32, 0
      %p149 = por %p147, %p148
      %s150 = ssub.s32 %s34, %s41
      %p151 = scmp.eq.s32.totalorder %s150, 0
      %s153 = sadd.s32 %s152, 1
      %s154 = scalar_select %p151, %s152, %s153
      %p157 = pneg %p151
      %p158 = scmp.eq.s32.totalorder %s26, 1
      %p159 = por %p157, %p158
      %p160 = scmp.ne.s32.totalorder %s152, %s155
      %p161 = scmp.eq.s32.totalorder %s26, 0
      %p162 = por %p160, %p161
      %p163 = scmp.ne.s32.totalorder %s152, %s155
      %p164 = scmp.eq.s32.totalorder %s31, 1
      %p165 = por %p163, %p164
      %p166 = scmp.ne.s32.totalorder %s155, %s156
      %p167 = scmp.eq.s32.totalorder %s31, 0
      %p168 = por %p166, %p167
      %p169 = scmp.ne.s32.totalorder %s155, %s156
      %p170 = scmp.eq.s32.totalorder %s32, 1
      %p171 = por %p169, %p170
      %p173 = scmp.ne.s32.totalorder %s156, %s172
      %p174 = scmp.eq.s32.totalorder %s32, 0
      %p175 = por %p173, %p174
      %s176 = ssub.s32 %s34, %s41
      %p177 = scmp.eq.s32.totalorder %s176, 0
      %s179 = sadd.s32 %s178, 1
      %s180 = scalar_select %p177, %s178, %s179
      %p183 = pneg %p177
      %p184 = scmp.eq.s32.totalorder %s26, 1
      %p185 = por %p183, %p184
      %p186 = scmp.ne.s32.totalorder %s178, %s181
      %p187 = scmp.eq.s32.totalorder %s26, 0
      %p188 = por %p186, %p187
      %p189 = scmp.ne.s32.totalorder %s178, %s181
      %p190 = scmp.eq.s32.totalorder %s31, 1
      %p191 = por %p189, %p190
      %p192 = scmp.ne.s32.totalorder %s181, %s182
      %p193 = scmp.eq.s32.totalorder %s31, 0
      %p194 = por %p192, %p193
      %p195 = scmp.ne.s32.totalorder %s181, %s182
      %p196 = scmp.eq.s32.totalorder %s32, 1
      %p197 = por %p195, %p196
      %p199 = scmp.ne.s32.totalorder %s182, %s198
      %p200 = scmp.eq.s32.totalorder %s32, 0
      %p201 = por %p199, %p200
      %s202 = ssub.s32 %s34, %s41
      %p203 = scmp.eq.s32.totalorder %s202, 0
      %s205 = sadd.s32 %s204, 1
      %s206 = scalar_select %p203, %s204, %s205
      %p209 = pneg %p203
      %p210 = scmp.eq.s32.totalorder %s26, 1
      %p211 = por %p209, %p210
      %p212 = scmp.ne.s32.totalorder %s204, %s207
      %p213 = scmp.eq.s32.totalorder %s26, 0
      %p214 = por %p212, %p213
      %p215 = scmp.ne.s32.totalorder %s204, %s207
      %p216 = scmp.eq.s32.totalorder %s31, 1
      %p217 = por %p215, %p216
      %p218 = scmp.ne.s32.totalorder %s207, %s208
      %p219 = scmp.eq.s32.totalorder %s31, 0
      %p220 = por %p218, %p219
      %p221 = scmp.ne.s32.totalorder %s207, %s208
      %p222 = scmp.eq.s32.totalorder %s32, 1
      %p223 = por %p221, %p222
      %p225 = scmp.ne.s32.totalorder %s208, %s224
      %p226 = scmp.eq.s32.totalorder %s32, 0
      %p227 = por %p225, %p226
      %s228 = ssub.s32 %s34, %s41
      %p229 = scmp.eq.s32.totalorder %s228, 0
      %s231 = sadd.s32 %s230, 1
      %s232 = scalar_select %p229, %s230, %s231
      %p235 = pneg %p229
      %p236 = scmp.eq.s32.totalorder %s26, 1
      %p237 = por %p235, %p236
      %p238 = scmp.ne.s32.totalorder %s230, %s233
      %p239 = scmp.eq.s32.totalorder %s26, 0
      %p240 = por %p238, %p239
      %p241 = scmp.ne.s32.totalorder %s230, %s233
      %p242 = scmp.eq.s32.totalorder %s31, 1
      %p243 = por %p241, %p242
      %p244 = scmp.ne.s32.totalorder %s233, %s234
      %p245 = scmp.eq.s32.totalorder %s31, 0
      %p246 = por %p244, %p245
      %p247 = scmp.ne.s32.totalorder %s233, %s234
      %p248 = scmp.eq.s32.totalorder %s32, 1
      %p249 = por %p247, %p248
      %p251 = scmp.ne.s32.totalorder %s234, %s250
      %p252 = scmp.eq.s32.totalorder %s32, 0
      %p253 = por %p251, %p252
      %s254 = ssub.s32 %s34, %s41
      %p255 = scmp.eq.s32.totalorder %s254, 0
      %s257 = sadd.s32 %s256, 1
      %s258 = scalar_select %p255, %s256, %s257
      %p261 = pneg %p255
      %p262 = scmp.eq.s32.totalorder %s26, 1
      %p263 = por %p261, %p262
      %p264 = scmp.ne.s32.totalorder %s256, %s259
      %p265 = scmp.eq.s32.totalorder %s26, 0
      %p266 = por %p264, %p265
      %p267 = scmp.ne.s32.totalorder %s256, %s259
      %p268 = scmp.eq.s32.totalorder %s31, 1
      %p269 = por %p267, %p268
      %p270 = scmp.ne.s32.totalorder %s259, %s260
      %p271 = scmp.eq.s32.totalorder %s31, 0
      %p272 = por %p270, %p271
      %p273 = scmp.ne.s32.totalorder %s259, %s260
      %p274 = scmp.eq.s32.totalorder %s32, 1
      %p275 = por %p273, %p274
      %p277 = scmp.ne.s32.totalorder %s260, %s276
      %p278 = scmp.eq.s32.totalorder %s32, 0
      %p279 = por %p277, %p278
      %s280 = ssub.s32 %s34, %s41
      %p281 = scmp.eq.s32.totalorder %s280, 0
      %s283 = sadd.s32 %s282, 1
      %s284 = scalar_select %p281, %s282, %s283
      %p287 = pneg %p281
      %p288 = scmp.eq.s32.totalorder %s26, 1
      %p289 = por %p287, %p288
      %p290 = scmp.ne.s32.totalorder %s282, %s285
      %p291 = scmp.eq.s32.totalorder %s26, 0
      %p292 = por %p290, %p291
      %p293 = scmp.ne.s32.totalorder %s282, %s285
      %p294 = scmp.eq.s32.totalorder %s31, 1
      %p295 = por %p293, %p294
      %p296 = scmp.ne.s32.totalorder %s285, %s286
      %p297 = scmp.eq.s32.totalorder %s31, 0
      %p298 = por %p296, %p297
      %p299 = scmp.ne.s32.totalorder %s285, %s286
      %p300 = scmp.eq.s32.totalorder %s32, 1
      %p301 = por %p299, %p300
      %p303 = scmp.ne.s32.totalorder %s286, %s302
      %p304 = scmp.eq.s32.totalorder %s32, 0
      %p305 = por %p303, %p304
      %s307 = sadd.s32 %s306, 1
      %p310 = scmp.eq.s32.totalorder %s26, 1
      %p311 = scmp.ne.s32.totalorder %s306, %s308
      %p312 = scmp.eq.s32.totalorder %s26, 0
      %p313 = por %p311, %p312
      %p314 = scmp.ne.s32.totalorder %s306, %s308
      %p315 = scmp.eq.s32.totalorder %s31, 1
      %p316 = por %p314, %p315
      %p317 = scmp.ne.s32.totalorder %s308, %s309
      %p318 = scmp.eq.s32.totalorder %s31, 0
      %p319 = por %p317, %p318
      %p320 = scmp.ne.s32.totalorder %s308, %s309
      %p321 = scmp.eq.s32.totalorder %s32, 1
      %p322 = por %p320, %p321
      %p324 = scmp.ne.s32.totalorder %s309, %s323
      %p325 = scmp.eq.s32.totalorder %s32, 0
      %p326 = por %p324, %p325
      %s328 = sadd.s32 %s327, 1
      %p331 = scmp.eq.s32.totalorder %s26, 1
      %p332 = scmp.ne.s32.totalorder %s327, %s329
      %p333 = scmp.eq.s32.totalorder %s26, 0
      %p334 = por %p332, %p333
      %p335 = scmp.ne.s32.totalorder %s327, %s329
      %p336 = scmp.eq.s32.totalorder %s31, 1
      %p337 = por %p335, %p336
      %p338 = scmp.ne.s32.totalorder %s329, %s330
      %p339 = scmp.eq.s32.totalorder %s31, 0
      %p340 = por %p338, %p339
      %p341 = scmp.ne.s32.totalorder %s329, %s330
      %p342 = scmp.eq.s32.totalorder %s32, 1
      %p343 = por %p341, %p342
      %p345 = scmp.ne.s32.totalorder %s330, %s344
      %p346 = scmp.eq.s32.totalorder %s32, 0
      %p347 = por %p345, %p346
      %s348 = ssub.s32 %s33, %s45
      %s349 = ssub.s32 %s34, %s41
      %s350 = sor.u32 %s348, %s349
      %p351 = scmp.eq.s32.totalorder %s350, 0
      %s353 = sadd.s32 %s352, 1
      %s354 = scalar_select %p351, %s352, %s353
      %p357 = pneg %p351
      %p358 = scmp.eq.s32.totalorder %s26, 1
      %p359 = por %p357, %p358
      %p360 = scmp.ne.s32.totalorder %s352, %s355
      %p361 = scmp.eq.s32.totalorder %s26, 0
      %p362 = por %p360, %p361
      %p363 = scmp.ne.s32.totalorder %s352, %s355
      %p364 = scmp.eq.s32.totalorder %s31, 1
      %p365 = por %p363, %p364
      %p366 = scmp.ne.s32.totalorder %s355, %s356
      %p367 = scmp.eq.s32.totalorder %s31, 0
      %p368 = por %p366, %p367
      %p369 = scmp.ne.s32.totalorder %s355, %s356
      %p370 = scmp.eq.s32.totalorder %s32, 1
      %p371 = por %p369, %p370
      %p373 = scmp.ne.s32.totalorder %s356, %s372
      %p374 = scmp.eq.s32.totalorder %s32, 0
      %p375 = por %p373, %p374
      %s376 = ssub.s32 %s33, %s45
      %s377 = ssub.s32 %s34, %s41
      %s378 = sor.u32 %s376, %s377
      %p379 = scmp.eq.s32.totalorder %s378, 0
      %s381 = sadd.s32 %s380, 1
      %s382 = scalar_select %p379, %s380, %s381
      %p385 = pneg %p379
      %p386 = scmp.eq.s32.totalorder %s26, 1
      %p387 = por %p385, %p386
      %p388 = scmp.ne.s32.totalorder %s380, %s383
      %p389 = scmp.eq.s32.totalorder %s26, 0
      %p390 = por %p388, %p389
      %p391 = scmp.ne.s32.totalorder %s380, %s383
      %p392 = scmp.eq.s32.totalorder %s31, 1
      %p393 = por %p391, %p392
      %p394 = scmp.ne.s32.totalorder %s383, %s384
      %p395 = scmp.eq.s32.totalorder %s31, 0
      %p396 = por %p394, %p395
      %p397 = scmp.ne.s32.totalorder %s383, %s384
      %p398 = scmp.eq.s32.totalorder %s32, 1
      %p399 = por %p397, %p398
      %p401 = scmp.ne.s32.totalorder %s384, %s400
      %p402 = scmp.eq.s32.totalorder %s32, 0
      %p403 = por %p401, %p402
      %p404 = scmp.le.s32.totalorder 1, %s26
      %p405 = scmp.lt.s32.totalorder %s26, 3
      %p406 = pnand %p404, %p405
      %p407 = pneg %p406
      // Predicated region
      $region9: #{fused_expand_dw_s2.1} parent=5 // pred_check
        _
      $region10: #{fused_expand_dw_s2.1} parent=5 // pred_check_branch
        %409 = sbr.rel (%p406) target = $region12
      $region11: #{fused_expand_dw_s2.1} parent=5 // pred_region
        %s410 = ssub.s32 %s26, 1
        // Predicated region
        $region13: #{fused_expand_dw_s2.1} parent=11 // pred_check
          %p411 = pneg %p168
        $region14: #{fused_expand_dw_s2.1} parent=11 // pred_check_branch
          %413 = sbr.rel (%p411) target = $region16
        $region15: #{fused_expand_dw_s2.1} parent=11 // pred_region
          %s414 = smul.u32 2, %s36
          %p415 = scmp.lt.s32.totalorder %s414, 1
          %s416 = scalar_select %p415, %s414, 1
          %s417 = smul.addr %s416, 4
          %s418 = scalar_lea.vmem %s4, %s417
          %s419 = smul.u32 2, %s36
        $region16: #{fused_expand_dw_s2.1} parent=11 // pred_fallthru
          _
        // Predicated region
        $region17: #{fused_expand_dw_s2.1} parent=11 // pred_check
          %p420 = pneg %p194
        $region18: #{fused_expand_dw_s2.1} parent=11 // pred_check_branch
          %422 = sbr.rel (%p420) target = $region20
        $region19: #{fused_expand_dw_s2.1} parent=11 // pred_region
          %s423 = smul.u32 2, %s36
          %p424 = scmp.lt.s32.totalorder %s423, 1
          %s425 = scalar_select %p424, %s423, 1
          %s426 = scalar_lea.vmem %s5, %s425
          %s427 = smul.u32 2, %s36
        $region20: #{fused_expand_dw_s2.1} parent=11 // pred_fallthru
          _
        // Predicated region
        $region21: #{fused_expand_dw_s2.1} parent=11 // pred_check
          %p428 = pneg %p220
        $region22: #{fused_expand_dw_s2.1} parent=11 // pred_check_branch
          %430 = sbr.rel (%p428) target = $region24
        $region23: #{fused_expand_dw_s2.1} parent=11 // pred_region
          %s431 = smul.u32 2, %s36
          %p432 = scmp.lt.s32.totalorder %s431, 1
          %s433 = scalar_select %p432, %s431, 1
          %s434 = scalar_lea.vmem %s6, %s433
          %s435 = smul.u32 2, %s36
        $region24: #{fused_expand_dw_s2.1} parent=11 // pred_fallthru
          _
        // Predicated region
        $region25: #{fused_expand_dw_s2.1} parent=11 // pred_check
          %p436 = pneg %p246
        $region26: #{fused_expand_dw_s2.1} parent=11 // pred_check_branch
          %438 = sbr.rel (%p436) target = $region28
        $region27: #{fused_expand_dw_s2.1} parent=11 // pred_region
          %s439 = smul.u32 2, %s36
          %p440 = scmp.lt.s32.totalorder %s439, 1
          %s441 = scalar_select %p440, %s439, 1
          %s442 = smul.addr %s441, 8
          %s443 = scalar_lea.vmem %s7, %s442
          %s444 = smul.u32 2, %s36
        $region28: #{fused_expand_dw_s2.1} parent=11 // pred_fallthru
          _
        // Predicated region
        $region29: #{fused_expand_dw_s2.1} parent=11 // pred_check
          %p445 = pneg %p272
        $region30: #{fused_expand_dw_s2.1} parent=11 // pred_check_branch
          %447 = sbr.rel (%p445) target = $region32
        $region31: #{fused_expand_dw_s2.1} parent=11 // pred_region
          %s448 = smul.u32 2, %s36
          %p449 = scmp.lt.s32.totalorder %s448, 1
          %s450 = scalar_select %p449, %s448, 1
          %s451 = scalar_lea.vmem %s8, %s450
          %s452 = smul.u32 2, %s36
        $region32: #{fused_expand_dw_s2.1} parent=11 // pred_fallthru
          _
        // Predicated region
        $region33: #{fused_expand_dw_s2.1} parent=11 // pred_check
          %p453 = pneg %p298
        $region34: #{fused_expand_dw_s2.1} parent=11 // pred_check_branch
          %455 = sbr.rel (%p453) target = $region36
        $region35: #{fused_expand_dw_s2.1} parent=11 // pred_region
          %s456 = smul.u32 2, %s36
          %p457 = scmp.lt.s32.totalorder %s456, 1
          %s458 = scalar_select %p457, %s456, 1
          %s459 = scalar_lea.vmem %s9, %s458
          %s460 = smul.u32 2, %s36
        $region36: #{fused_expand_dw_s2.1} parent=11 // pred_fallthru
          _
        // Predicated region
        $region37: #{fused_expand_dw_s2.1} parent=11 // pred_check
          %p461 = pneg %p319
        $region38: #{fused_expand_dw_s2.1} parent=11 // pred_check_branch
          %463 = sbr.rel (%p461) target = $region40
        $region39: #{fused_expand_dw_s2.1} parent=11 // pred_region
          _
        $region40: #{fused_expand_dw_s2.1} parent=11 // pred_fallthru
          _
        // Predicated region
        $region41: #{fused_expand_dw_s2.1} parent=11 // pred_check
          %p464 = pneg %p340
        $region42: #{fused_expand_dw_s2.1} parent=11 // pred_check_branch
          %466 = sbr.rel (%p464) target = $region44
        $region43: #{fused_expand_dw_s2.1} parent=11 // pred_region
          _
        $region44: #{fused_expand_dw_s2.1} parent=11 // pred_fallthru
          _
      $region12: #{fused_expand_dw_s2.1} parent=5 // pred_fallthru
        _
      %p467 = scmp.lt.s32.totalorder %s26, 2
      // Predicated region
      $region45: #{fused_expand_dw_s2.1} parent=5 // pred_check
        %p468 = pneg %p467
      $region46: #{fused_expand_dw_s2.1} parent=5 // pred_check_branch
        %470 = sbr.rel (%p468) target = $region48
      $region47: #{fused_expand_dw_s2.1} parent=5 // pred_region
        // Predicated region
        $region49: #{fused_expand_dw_s2.1} parent=47 // pred_check
          %p471 = pneg %p58
        $region50: #{fused_expand_dw_s2.1} parent=47 // pred_check_branch
          %473 = sbr.rel (%p471) target = $region52
        $region51: #{fused_expand_dw_s2.1} parent=47 // pred_region
          %p474 = scmp.lt.s32.totalorder %s33, 1
          %s475 = scalar_select %p474, %s33, 1
          %s476 = smul.addr %s475, 2
          %s477 = smul.addr %s476, 4
          %s478 = scalar_lea.vmem %s0, %s477
        $region52: #{fused_expand_dw_s2.1} parent=47 // pred_fallthru
          _
        // Predicated region
        $region53: #{fused_expand_dw_s2.1} parent=47 // pred_check
          %p479 = pneg %p84
        $region54: #{fused_expand_dw_s2.1} parent=47 // pred_check_branch
          %481 = sbr.rel (%p479) target = $region56
        $region55: #{fused_expand_dw_s2.1} parent=47 // pred_region
          %p482 = scmp.lt.s32.totalorder %s33, 1
          %s483 = scalar_select %p482, %s33, 1
          %s484 = smul.addr %s483, 2
          %s485 = smul.addr %s484, 4
          %s486 = scalar_lea.vmem %s1, %s485
        $region56: #{fused_expand_dw_s2.1} parent=47 // pred_fallthru
          _
        // Predicated region
        $region57: #{fused_expand_dw_s2.1} parent=47 // pred_check
          %p487 = pneg %p110
        $region58: #{fused_expand_dw_s2.1} parent=47 // pred_check_branch
          %489 = sbr.rel (%p487) target = $region60
        $region59: #{fused_expand_dw_s2.1} parent=47 // pred_region
          %p490 = scmp.lt.s32.totalorder %s33, 1
          %s491 = scalar_select %p490, %s33, 1
          %s492 = smul.addr %s491, 2
          %s493 = smul.addr %s492, 4
          %s494 = scalar_lea.vmem %s2, %s493
        $region60: #{fused_expand_dw_s2.1} parent=47 // pred_fallthru
          _
        // Predicated region
        $region61: #{fused_expand_dw_s2.1} parent=47 // pred_check
          %p495 = pneg %p136
        $region62: #{fused_expand_dw_s2.1} parent=47 // pred_check_branch
          %497 = sbr.rel (%p495) target = $region64
        $region63: #{fused_expand_dw_s2.1} parent=47 // pred_region
          %p498 = scmp.lt.s32.totalorder %s33, 1
          %s499 = scalar_select %p498, %s33, 1
          %s500 = smul.addr %s499, 2
          %s501 = smul.addr %s500, 4
          %s502 = scalar_lea.vmem %s3, %s501
        $region64: #{fused_expand_dw_s2.1} parent=47 // pred_fallthru
          _
      $region48: #{fused_expand_dw_s2.1} parent=5 // pred_fallthru
        _
      %p503 = scmp.le.s32.totalorder 1, %s26
      %p504 = scmp.lt.s32.totalorder %s26, 3
      %p505 = pnand %p503, %p504
      %p506 = pneg %p505
      // Predicated region
      $region65: #{fused_expand_dw_s2.1} parent=5 // pred_check
        _
      $region66: #{fused_expand_dw_s2.1} parent=5 // pred_check_branch
        %508 = sbr.rel (%p505) target = $region68
      $region67: #{fused_expand_dw_s2.1} parent=5 // pred_region
        %s509 = ssub.s32 %s26, 1
        %p510 = scmp.lt.s32.totalorder %s35, 1
        %s511 = scalar_select %p510, %s35, 1
        %s512 = smul.addr %s511, 2
        %s513 = smul.addr %s512, 4
        %s514 = scalar_lea.vmem %s0, %s513
        %p515 = pneg %p64
        %p516 = pneg %p61
        %p517 = scmp.lt.s32.totalorder %s35, 1
        %s518 = scalar_select %p517, %s35, 1
        %s519 = smul.addr %s518, 2
        %s520 = smul.addr %s519, 4
        %s521 = scalar_lea.vmem %s1, %s520
        %p522 = pneg %p90
        %p523 = pneg %p87
        %p524 = scmp.lt.s32.totalorder %s35, 1
        %s525 = scalar_select %p524, %s35, 1
        %s526 = smul.addr %s525, 2
        %s527 = smul.addr %s526, 4
        %s528 = scalar_lea.vmem %s2, %s527
        %p529 = pneg %p116
        %p530 = pneg %p113
        %p531 = scmp.lt.s32.totalorder %s35, 1
        %s532 = scalar_select %p531, %s35, 1
        %s533 = smul.addr %s532, 2
        %s534 = smul.addr %s533, 4
        %s535 = scalar_lea.vmem %s3, %s534
        %p536 = pneg %p142
        %p537 = pneg %p139
        %s538 = smul.u32 2, %s36
        %p539 = scmp.lt.s32.totalorder %s538, 1
        %s540 = scalar_select %p539, %s538, 1
        %s541 = smul.addr %s540, 4
        %s542 = scalar_lea.vmem %s4, %s541
        %p543 = pneg %p168
        %p544 = pneg %p165
        %s545 = smul.u32 2, %s36
        %p546 = scmp.lt.s32.totalorder %s545, 1
        %s547 = scalar_select %p546, %s545, 1
        %s548 = scalar_lea.vmem %s5, %s547
        %p549 = pneg %p194
        %p550 = pneg %p191
        %s551 = smul.u32 2, %s36
        %p552 = scmp.lt.s32.totalorder %s551, 1
        %s553 = scalar_select %p552, %s551, 1
        %s554 = scalar_lea.vmem %s6, %s553
        %p555 = pneg %p220
        %p556 = pneg %p217
        %s557 = smul.u32 2, %s36
        %p558 = scmp.lt.s32.totalorder %s557, 1
        %s559 = scalar_select %p558, %s557, 1
        %s560 = smul.addr %s559, 8
        %s561 = scalar_lea.vmem %s7, %s560
        %p562 = pneg %p246
        %p563 = pneg %p243
        %s564 = smul.u32 2, %s36
        %p565 = scmp.lt.s32.totalorder %s564, 1
        %s566 = scalar_select %p565, %s564, 1
        %s567 = scalar_lea.vmem %s8, %s566
        %p568 = pneg %p272
        %p569 = pneg %p269
        %s570 = smul.u32 2, %s36
        %p571 = scmp.lt.s32.totalorder %s570, 1
        %s572 = scalar_select %p571, %s570, 1
        %s573 = scalar_lea.vmem %s9, %s572
        %p574 = pneg %p298
        %p575 = pneg %p295
        %p576 = pneg %p319
        %p577 = pneg %p316
        %p578 = pneg %p340
        %p579 = pneg %p337
        %p580 = pneg %p368
        %p581 = pneg %p365
        %s582 = sand.u32 %s355, 1
        %s583 = scalar_lea.sflag [#allocation6], %s582
        %s584 = sand.u32 %s355, 1
        %s585 = smul.addr %s584, 16
        %s586 = scalar_lea.vmem [#allocation5], %s585
        %p587 = pneg %p396
        %p588 = pneg %p393
        %s589 = sand.u32 %s383, 1
        %s590 = scalar_lea.sflag [#allocation8], %s589
        %s591 = sand.u32 %s383, 1
        %s592 = smul.addr %s591, 16
        %s593 = scalar_lea.vmem [#allocation7], %s592
        %p594 = scmp.lt.s32.totalorder %s35, 1
        %s595 = scalar_select %p594, %s35, 1
        %s596 = smul.addr %s595, 2
        %s597 = smul.addr %s596, 4
        %s598 = scalar_lea.vmem %s0, %s597
        %p599 = scmp.lt.s32.totalorder %s35, 1
        %s600 = scalar_select %p599, %s35, 1
        %s601 = smul.addr %s600, 2
        %s602 = smul.addr %s601, 4
        %s603 = scalar_lea.vmem %s1, %s602
        %p604 = scmp.lt.s32.totalorder %s35, 1
        %s605 = scalar_select %p604, %s35, 1
        %s606 = smul.addr %s605, 2
        %s607 = smul.addr %s606, 4
        %s608 = scalar_lea.vmem %s2, %s607
        %p609 = scmp.lt.s32.totalorder %s35, 1
        %s610 = scalar_select %p609, %s35, 1
        %s611 = smul.addr %s610, 2
        %s612 = smul.addr %s611, 4
        %s613 = scalar_lea.vmem %s3, %s612
        %s614 = smul.u32 2, %s36
        %p615 = scmp.lt.s32.totalorder %s614, 1
        %s616 = scalar_select %p615, %s614, 1
        %s617 = smul.addr %s616, 4
        %s618 = scalar_lea.vmem %s4, %s617
        %s619 = smul.u32 2, %s36
        %s620 = smul.u32 2, %s36
        %p621 = scmp.lt.s32.totalorder %s620, 1
        %s622 = scalar_select %p621, %s620, 1
        %s623 = scalar_lea.vmem %s5, %s622
        %s624 = smul.u32 2, %s36
        %s625 = smul.u32 2, %s36
        %p626 = scmp.lt.s32.totalorder %s625, 1
        %s627 = scalar_select %p626, %s625, 1
        %s628 = scalar_lea.vmem %s6, %s627
        %s629 = smul.u32 2, %s36
        %s630 = smul.u32 2, %s36
        %p631 = scmp.lt.s32.totalorder %s630, 1
        %s632 = scalar_select %p631, %s630, 1
        %s633 = smul.addr %s632, 8
        %s634 = scalar_lea.vmem %s7, %s633
        %s635 = smul.u32 2, %s36
        %s636 = smul.u32 2, %s36
        %p637 = scmp.lt.s32.totalorder %s636, 1
        %s638 = scalar_select %p637, %s636, 1
        %s639 = scalar_lea.vmem %s8, %s638
        %s640 = smul.u32 2, %s36
        %s641 = smul.u32 2, %s36
        %p642 = scmp.lt.s32.totalorder %s641, 1
        %s643 = scalar_select %p642, %s641, 1
        %s644 = scalar_lea.vmem %s9, %s643
        %s645 = smul.u32 2, %s36
        %s646 = smul.u32 2, %s36
        %s647 = smul.u32 2, %s36
        %v649 = vld [vmem:[%s598] sm:$0xf]
        %v650 = vld [vmem:[%s598 + $0x4] sm:$0xf]
        %v651 = vld [vmem:[%s618] sm:$0xff]
        %v652 = vld [vmem:[%s618 + $0x8] sm:$0xff]
        %v653 = vld [vmem:[%s618 + $0x10] sm:$0xff]
        %v654 = vld [vmem:[%s618 + $0x18] sm:$0xff]
        %v655 = vld [vmem:[%s618 + $0x20] sm:$0xff]
        %v656 = vld [vmem:[%s618 + $0x28] sm:$0xff]
        %v657 = vld [vmem:[%s618 + $0x30] sm:$0xff]
        %v658 = vld [vmem:[%s618 + $0x38] sm:$0xff]
        %v661 = vunpack.c.l.b16 %v649
        %v662 = vunpack.c.l.b16 %v650
        %v663 = vpack.c.b16 %v662, %v661
        %v672 = vunpack.c.l.b16 %v651
        %v673 = vunpack.c.h.b16 %v651
        %v674 = vunpack.c.l.b16 %v652
        %v675 = vunpack.c.h.b16 %v652
        %v676 = vunpack.c.l.b16 %v653
        %v677 = vunpack.c.h.b16 %v653
        %v678 = vunpack.c.l.b16 %v654
        %v679 = vunpack.c.h.b16 %v654
        %v680 = vunpack.c.l.b16 %v655
        %v681 = vunpack.c.h.b16 %v655
        %v682 = vunpack.c.l.b16 %v656
        %v683 = vunpack.c.h.b16 %v656
        %v684 = vunpack.c.l.b16 %v657
        %v685 = vunpack.c.h.b16 %v657
        %v686 = vunpack.c.l.b16 %v658
        %v687 = vunpack.c.h.b16 %v658
        %v688 = vpack.c.b16 %v674, %v672
        %v689 = vpack.c.b16 %v675, %v673
        %v690 = vpack.c.b16 %v678, %v676
        %v691 = vpack.c.b16 %v679, %v677
        %v692 = vpack.c.b16 %v682, %v680
        %v693 = vpack.c.b16 %v683, %v681
        %v694 = vpack.c.b16 %v686, %v684
        %v695 = vpack.c.b16 %v687, %v685
        %vm704 = vcmask 523264
        %v706 = vsel %vm704, %v663, 0
        %708 = vmatprep.subr.bf16.mxu0 0
        %709 = vmatpush1.bf16.msra.mxu0 0
        %710 = vmatprep.subr.bf16.mxu0 0
        %711 = vmatpush1.bf16.msra.mxu0 0
        %712 = vmatprep.subr.bf16.mxu0 0
        %713 = vmatpush1.bf16.msra.mxu0 0
        %714 = vmatprep.subr.bf16.mxu0 0
        %715 = vmatpush1.bf16.msra.mxu0 0
        %716 = vmatprep.subr.bf16.mxu0 %v695
        %717 = vmatpush1.bf16.msra.mxu0 %v694
        %718 = vmatprep.subr.bf16.mxu0 %v693
        %719 = vmatpush1.bf16.msra.mxu0 %v692
        %720 = vmatprep.subr.bf16.mxu0 %v691
        %721 = vmatpush1.bf16.msra.mxu0 %v690
        %722 = vmatprep.subr.bf16.mxu0 %v689
        %723 = vmatpush1.bf16.msra.mxu0 %v688
        %724 = vmatprep.subr.bf16.mxu0 0
        %725 = vmatpush2.bf16.msra.mxu0 0
        %726 = vmatprep.subr.bf16.mxu0 0
        %727 = vmatpush2.bf16.msra.mxu0 0
        %728 = vmatprep.subr.bf16.mxu0 0
        %729 = vmatpush2.bf16.msra.mxu0 0
        %730 = vmatprep.subr.bf16.mxu0 0
        %731 = vmatpush2.bf16.msra.mxu0 0
        %732 = vmatprep.subr.bf16.mxu0 0
        %733 = vmatpush2.bf16.msra.mxu0 0
        %734 = vmatprep.subr.bf16.mxu0 0
        %735 = vmatpush2.bf16.msra.mxu0 0
        %736 = vmatprep.subr.bf16.mxu0 0
        %737 = vmatpush2.bf16.msra.mxu0 0
        %738 = vmatprep.subr.bf16.mxu0 0
        %739 = vmatpush2.bf16.msra.mxu0 0
        %740 = vmatprep.mubr.bf16.mxu0 0
        %741 = vmatmul.mubr.bf16.gmra.mxu0 %v706
        %v742 = vpop.f32.mrf.mxu0
        %v743 = vadd.f32 0.0, %v742
        %v744 = vpop.f32.mrf.mxu0
        %v745 = vadd.f32 0.0, %v744
        %v746 = vpop.f32.mrf.mxu0
        %v747 = vadd.f32 0.0, %v746
        %v748 = vpop.f32.mrf.mxu0
        %v749 = vadd.f32 0.0, %v748
        %750 = vdwg.mxu0
        %v751 = vld [vmem:[%s623] sm:$0x3]
        %v753 = vlaneseq
        %v754 = vshrl.u32 %v753, 7
        %v755 = vsub.s32 0, %v754
        %v756 = vrot.slane %v751, %v755
        %v757 = vlaneseq
        %v758 = vshrl.u32 %v757, 7
        %v759 = vsub.s32 1, %v758
        %v760 = vrot.slane %v751, %v759
        %v763 = vmul.f32 %v743, %v756
        %v764 = vmul.f32 %v745, %v760
        %v765 = vmul.f32 %v747, %v756
        %v766 = vmul.f32 %v749, %v760
        %v767 = vld [vmem:[%s628] sm:$0x3]
        %v769 = vlaneseq
        %v770 = vshrl.u32 %v769, 7
        %v771 = vsub.s32 0, %v770
        %v772 = vrot.slane %v767, %v771
        %v773 = vlaneseq
        %v774 = vshrl.u32 %v773, 7
        %v775 = vsub.s32 1, %v774
        %v776 = vrot.slane %v767, %v775
        %v779 = vadd.f32 %v763, %v772
        %v780 = vadd.f32 %v764, %v776
        %v781 = vadd.f32 %v765, %v772
        %v782 = vadd.f32 %v766, %v776
        %v783 = vxor.u32 %v779, 2147483648
        %v784 = vxor.u32 %v780, 2147483648
        %v785 = vxor.u32 %v781, 2147483648
        %v786 = vxor.u32 %v782, 2147483648
        %v787 = vmul.f32 %v783, 1.442695
        %v788 = vpow.pop %v787
        %v789 = vmul.f32 %v784, 1.442695
        %v790 = vpow.pop %v789
        %v791 = vmul.f32 %v785, 1.442695
        %v792 = vpow.pop %v791
        %v793 = vmul.f32 %v786, 1.442695
        %v794 = vpow.pop %v793
        %v795 = vadd.f32 %v788, 1.0
        %v796 = vadd.f32 %v790, 1.0
        %v797 = vadd.f32 %v792, 1.0
        %v798 = vadd.f32 %v794, 1.0
        %v799 = vrcp.pop %v795
        %v800 = vmul.f32 1.0, %v799
        %v801 = vrcp.pop %v796
        %v802 = vmul.f32 1.0, %v801
        %v803 = vrcp.pop %v797
        %v804 = vmul.f32 1.0, %v803
        %v805 = vrcp.pop %v798
        %v806 = vmul.f32 1.0, %v805
        %v807 = vmul.f32 %v779, %v800
        %v808 = vmul.f32 %v780, %v802
        %v809 = vmul.f32 %v781, %v804
        %v810 = vmul.f32 %v782, %v806
        %v811 = vld [vmem:[%s603] sm:$0xf]
        %v812 = vld [vmem:[%s603 + $0x4] sm:$0xf]
        %v815 = vunpack.c.l.b16 %v811
        %v816 = vunpack.c.l.b16 %v812
        %v817 = vpack.c.b16 %v816, %v815
        %v819 = vsel %vm704, %v817, 0
        %821 = vmatprep.subr.bf16.mxu0 0
        %822 = vmatpush1.bf16.msra.mxu0 0
        %823 = vmatprep.subr.bf16.mxu0 0
        %824 = vmatpush1.bf16.msra.mxu0 0
        %825 = vmatprep.subr.bf16.mxu0 0
        %826 = vmatpush1.bf16.msra.mxu0 0
        %827 = vmatprep.subr.bf16.mxu0 0
        %828 = vmatpush1.bf16.msra.mxu0 0
        %829 = vmatprep.subr.bf16.mxu0 %v695
        %830 = vmatpush1.bf16.msra.mxu0 %v694
        %831 = vmatprep.subr.bf16.mxu0 %v693
        %832 = vmatpush1.bf16.msra.mxu0 %v692
        %833 = vmatprep.subr.bf16.mxu0 %v691
        %834 = vmatpush1.bf16.msra.mxu0 %v690
        %835 = vmatprep.subr.bf16.mxu0 %v689
        %836 = vmatpush1.bf16.msra.mxu0 %v688
        %837 = vmatprep.subr.bf16.mxu0 0
        %838 = vmatpush2.bf16.msra.mxu0 0
        %839 = vmatprep.subr.bf16.mxu0 0
        %840 = vmatpush2.bf16.msra.mxu0 0
        %841 = vmatprep.subr.bf16.mxu0 0
        %842 = vmatpush2.bf16.msra.mxu0 0
        %843 = vmatprep.subr.bf16.mxu0 0
        %844 = vmatpush2.bf16.msra.mxu0 0
        %845 = vmatprep.subr.bf16.mxu0 0
        %846 = vmatpush2.bf16.msra.mxu0 0
        %847 = vmatprep.subr.bf16.mxu0 0
        %848 = vmatpush2.bf16.msra.mxu0 0
        %849 = vmatprep.subr.bf16.mxu0 0
        %850 = vmatpush2.bf16.msra.mxu0 0
        %851 = vmatprep.subr.bf16.mxu0 0
        %852 = vmatpush2.bf16.msra.mxu0 0
        %853 = vmatprep.mubr.bf16.mxu0 0
        %854 = vmatmul.mubr.bf16.gmra.mxu0 %v819
        %v855 = vpop.f32.mrf.mxu0
        %v856 = vadd.f32 0.0, %v855
        %v857 = vpop.f32.mrf.mxu0
        %v858 = vadd.f32 0.0, %v857
        %v859 = vpop.f32.mrf.mxu0
        %v860 = vadd.f32 0.0, %v859
        %v861 = vpop.f32.mrf.mxu0
        %v862 = vadd.f32 0.0, %v861
        %863 = vdwg.mxu0
        %v864 = vmul.f32 %v856, %v756
        %v865 = vmul.f32 %v858, %v760
        %v866 = vmul.f32 %v860, %v756
        %v867 = vmul.f32 %v862, %v760
        %v868 = vadd.f32 %v864, %v772
        %v869 = vadd.f32 %v865, %v776
        %v870 = vadd.f32 %v866, %v772
        %v871 = vadd.f32 %v867, %v776
        %v872 = vxor.u32 %v868, 2147483648
        %v873 = vxor.u32 %v869, 2147483648
        %v874 = vxor.u32 %v870, 2147483648
        %v875 = vxor.u32 %v871, 2147483648
        %v876 = vmul.f32 %v872, 1.442695
        %v877 = vpow.pop %v876
        %v878 = vmul.f32 %v873, 1.442695
        %v879 = vpow.pop %v878
        %v880 = vmul.f32 %v874, 1.442695
        %v881 = vpow.pop %v880
        %v882 = vmul.f32 %v875, 1.442695
        %v883 = vpow.pop %v882
        %v884 = vadd.f32 %v877, 1.0
        %v885 = vadd.f32 %v879, 1.0
        %v886 = vadd.f32 %v881, 1.0
        %v887 = vadd.f32 %v883, 1.0
        %v888 = vrcp.pop %v884
        %v889 = vmul.f32 1.0, %v888
        %v890 = vrcp.pop %v885
        %v891 = vmul.f32 1.0, %v890
        %v892 = vrcp.pop %v886
        %v893 = vmul.f32 1.0, %v892
        %v894 = vrcp.pop %v887
        %v895 = vmul.f32 1.0, %v894
        %v896 = vmul.f32 %v868, %v889
        %v897 = vmul.f32 %v869, %v891
        %v898 = vmul.f32 %v870, %v893
        %v899 = vmul.f32 %v871, %v895
        %v900 = vld [vmem:[%s608] sm:$0xf]
        %v901 = vld [vmem:[%s608 + $0x4] sm:$0xf]
        %v904 = vunpack.c.l.b16 %v900
        %v905 = vunpack.c.l.b16 %v901
        %v906 = vpack.c.b16 %v905, %v904
        %v908 = vsel %vm704, %v906, 0
        %910 = vmatprep.subr.bf16.mxu0 0
        %911 = vmatpush1.bf16.msra.mxu0 0
        %912 = vmatprep.subr.bf16.mxu0 0
        %913 = vmatpush1.bf16.msra.mxu0 0
        %914 = vmatprep.subr.bf16.mxu0 0
        %915 = vmatpush1.bf16.msra.mxu0 0
        %916 = vmatprep.subr.bf16.mxu0 0
        %917 = vmatpush1.bf16.msra.mxu0 0
        %918 = vmatprep.subr.bf16.mxu0 %v695
        %919 = vmatpush1.bf16.msra.mxu0 %v694
        %920 = vmatprep.subr.bf16.mxu0 %v693
        %921 = vmatpush1.bf16.msra.mxu0 %v692
        %922 = vmatprep.subr.bf16.mxu0 %v691
        %923 = vmatpush1.bf16.msra.mxu0 %v690
        %924 = vmatprep.subr.bf16.mxu0 %v689
        %925 = vmatpush1.bf16.msra.mxu0 %v688
        %926 = vmatprep.subr.bf16.mxu0 0
        %927 = vmatpush2.bf16.msra.mxu0 0
        %928 = vmatprep.subr.bf16.mxu0 0
        %929 = vmatpush2.bf16.msra.mxu0 0
        %930 = vmatprep.subr.bf16.mxu0 0
        %931 = vmatpush2.bf16.msra.mxu0 0
        %932 = vmatprep.subr.bf16.mxu0 0
        %933 = vmatpush2.bf16.msra.mxu0 0
        %934 = vmatprep.subr.bf16.mxu0 0
        %935 = vmatpush2.bf16.msra.mxu0 0
        %936 = vmatprep.subr.bf16.mxu0 0
        %937 = vmatpush2.bf16.msra.mxu0 0
        %938 = vmatprep.subr.bf16.mxu0 0
        %939 = vmatpush2.bf16.msra.mxu0 0
        %940 = vmatprep.subr.bf16.mxu0 0
        %941 = vmatpush2.bf16.msra.mxu0 0
        %942 = vmatprep.mubr.bf16.mxu0 0
        %943 = vmatmul.mubr.bf16.gmra.mxu0 %v908
        %v944 = vpop.f32.mrf.mxu0
        %v945 = vadd.f32 0.0, %v944
        %v946 = vpop.f32.mrf.mxu0
        %v947 = vadd.f32 0.0, %v946
        %v948 = vpop.f32.mrf.mxu0
        %v949 = vadd.f32 0.0, %v948
        %v950 = vpop.f32.mrf.mxu0
        %v951 = vadd.f32 0.0, %v950
        %952 = vdwg.mxu0
        %v953 = vmul.f32 %v945, %v756
        %v954 = vmul.f32 %v947, %v760
        %v955 = vmul.f32 %v949, %v756
        %v956 = vmul.f32 %v951, %v760
        %v957 = vadd.f32 %v953, %v772
        %v958 = vadd.f32 %v954, %v776
        %v959 = vadd.f32 %v955, %v772
        %v960 = vadd.f32 %v956, %v776
        %v961 = vxor.u32 %v957, 2147483648
        %v962 = vxor.u32 %v958, 2147483648
        %v963 = vxor.u32 %v959, 2147483648
        %v964 = vxor.u32 %v960, 2147483648
        %v965 = vmul.f32 %v961, 1.442695
        %v966 = vpow.pop %v965
        %v967 = vmul.f32 %v962, 1.442695
        %v968 = vpow.pop %v967
        %v969 = vmul.f32 %v963, 1.442695
        %v970 = vpow.pop %v969
        %v971 = vmul.f32 %v964, 1.442695
        %v972 = vpow.pop %v971
        %v973 = vadd.f32 %v966, 1.0
        %v974 = vadd.f32 %v968, 1.0
        %v975 = vadd.f32 %v970, 1.0
        %v976 = vadd.f32 %v972, 1.0
        %v977 = vrcp.pop %v973
        %v978 = vmul.f32 1.0, %v977
        %v979 = vrcp.pop %v974
        %v980 = vmul.f32 1.0, %v979
        %v981 = vrcp.pop %v975
        %v982 = vmul.f32 1.0, %v981
        %v983 = vrcp.pop %v976
        %v984 = vmul.f32 1.0, %v983
        %v985 = vmul.f32 %v957, %v978
        %v986 = vmul.f32 %v958, %v980
        %v987 = vmul.f32 %v959, %v982
        %v988 = vmul.f32 %v960, %v984
        %v989 = vld [vmem:[%s613] sm:$0xf]
        %v990 = vld [vmem:[%s613 + $0x4] sm:$0xf]
        %v993 = vunpack.c.l.b16 %v989
        %v994 = vunpack.c.l.b16 %v990
        %v995 = vpack.c.b16 %v994, %v993
        %v997 = vsel %vm704, %v995, 0
        %999 = vmatprep.subr.bf16.mxu0 0
        %1000 = vmatpush1.bf16.msra.mxu0 0
        %1001 = vmatprep.subr.bf16.mxu0 0
        %1002 = vmatpush1.bf16.msra.mxu0 0
        %1003 = vmatprep.subr.bf16.mxu0 0
        %1004 = vmatpush1.bf16.msra.mxu0 0
        %1005 = vmatprep.subr.bf16.mxu0 0
        %1006 = vmatpush1.bf16.msra.mxu0 0
        %1007 = vmatprep.subr.bf16.mxu0 %v695
        %1008 = vmatpush1.bf16.msra.mxu0 %v694
        %1009 = vmatprep.subr.bf16.mxu0 %v693
        %1010 = vmatpush1.bf16.msra.mxu0 %v692
        %1011 = vmatprep.subr.bf16.mxu0 %v691
        %1012 = vmatpush1.bf16.msra.mxu0 %v690
        %1013 = vmatprep.subr.bf16.mxu0 %v689
        %1014 = vmatpush1.bf16.msra.mxu0 %v688
        %1015 = vmatprep.subr.bf16.mxu0 0
        %1016 = vmatpush2.bf16.msra.mxu0 0
        %1017 = vmatprep.subr.bf16.mxu0 0
        %1018 = vmatpush2.bf16.msra.mxu0 0
        %1019 = vmatprep.subr.bf16.mxu0 0
        %1020 = vmatpush2.bf16.msra.mxu0 0
        %1021 = vmatprep.subr.bf16.mxu0 0
        %1022 = vmatpush2.bf16.msra.mxu0 0
        %1023 = vmatprep.subr.bf16.mxu0 0
        %1024 = vmatpush2.bf16.msra.mxu0 0
        %1025 = vmatprep.subr.bf16.mxu0 0
        %1026 = vmatpush2.bf16.msra.mxu0 0
        %1027 = vmatprep.subr.bf16.mxu0 0
        %1028 = vmatpush2.bf16.msra.mxu0 0
        %1029 = vmatprep.subr.bf16.mxu0 0
        %1030 = vmatpush2.bf16.msra.mxu0 0
        %1031 = vmatprep.mubr.bf16.mxu0 0
        %1032 = vmatmul.mubr.bf16.gmra.mxu0 %v997
        %v1033 = vpop.f32.mrf.mxu0
        %v1034 = vadd.f32 0.0, %v1033
        %v1035 = vpop.f32.mrf.mxu0
        %v1036 = vadd.f32 0.0, %v1035
        %v1037 = vpop.f32.mrf.mxu0
        %v1038 = vadd.f32 0.0, %v1037
        %v1039 = vpop.f32.mrf.mxu0
        %v1040 = vadd.f32 0.0, %v1039
        %1041 = vdwg.mxu0
        %v1042 = vmul.f32 %v1034, %v756
        %v1043 = vmul.f32 %v1036, %v760
        %v1044 = vmul.f32 %v1038, %v756
        %v1045 = vmul.f32 %v1040, %v760
        %v1046 = vadd.f32 %v1042, %v772
        %v1047 = vadd.f32 %v1043, %v776
        %v1048 = vadd.f32 %v1044, %v772
        %v1049 = vadd.f32 %v1045, %v776
        %v1050 = vxor.u32 %v1046, 2147483648
        %v1051 = vxor.u32 %v1047, 2147483648
        %v1052 = vxor.u32 %v1048, 2147483648
        %v1053 = vxor.u32 %v1049, 2147483648
        %v1054 = vmul.f32 %v1050, 1.442695
        %v1055 = vpow.pop %v1054
        %v1056 = vmul.f32 %v1051, 1.442695
        %v1057 = vpow.pop %v1056
        %v1058 = vmul.f32 %v1052, 1.442695
        %v1059 = vpow.pop %v1058
        %v1060 = vmul.f32 %v1053, 1.442695
        %v1061 = vpow.pop %v1060
        %v1062 = vadd.f32 %v1055, 1.0
        %v1063 = vadd.f32 %v1057, 1.0
        %v1064 = vadd.f32 %v1059, 1.0
        %v1065 = vadd.f32 %v1061, 1.0
        %v1066 = vrcp.pop %v1062
        %v1067 = vmul.f32 1.0, %v1066
        %v1068 = vrcp.pop %v1063
        %v1069 = vmul.f32 1.0, %v1068
        %v1070 = vrcp.pop %v1064
        %v1071 = vmul.f32 1.0, %v1070
        %v1072 = vrcp.pop %v1065
        %v1073 = vmul.f32 1.0, %v1072
        %v1074 = vmul.f32 %v1046, %v1067
        %v1075 = vmul.f32 %v1047, %v1069
        %v1076 = vmul.f32 %v1048, %v1071
        %v1077 = vmul.f32 %v1049, %v1073
        %v1078 = vlaneseq
        %vm1079 = vcmp.ge.s32.totalorder %v1078, 0
        %vm1080 = vcmp.lt.s32.totalorder %v1078, 256
        %vm1081 = vmand %vm1079, %vm1080
        %1082 = vst.msk [vmem:[#allocation2] ss:$8 sm:$0x3] %vm1081, 0.0
        %1083 = vst.msk [vmem:[#allocation2] ss:$8 sm:$0x0] %vm1081, 0.0
        %vm1088 = vcmask 1040384
        %v1089 = vrot.slane %v896, 7
        %v1090 = vrot.slane %v897, 7
        %v1091 = vrot.slane %v898, 7
        %v1092 = vsel %vm1088, %v1089, %v1091
        %v1093 = vrot.slane %v899, 7
        %v1094 = vsel %vm1088, %v1090, %v1093
        %1101 = vst [vmem:[#allocation2] sm:$0xfe] %v1089
        %1102 = vst [vmem:[#allocation2 + $0x8] sm:$0xfe] %v1090
        %1103 = vst [vmem:[#allocation2 + $0x10] sm:$0xff] %v1092
        %1104 = vst [vmem:[#allocation2 + $0x18] sm:$0xff] %v1094
        %1105 = vst [vmem:[#allocation2 + $0x20] sm:$0x1] %v1091
        %1106 = vst [vmem:[#allocation2 + $0x28] sm:$0x1] %v1093
        %1107 = vst [vmem:[#allocation3] sm:$0xf] 0.0
        %1108 = vst [vmem:[#allocation3 + $0x8] sm:$0xf] 0.0
        %vm1113 = vcmask 1043456
        %v1114 = vrot.slane %v985, 4
        %v1115 = vrot.slane %v986, 4
        %v1116 = vrot.slane %v987, 4
        %v1117 = vsel %vm1113, %v1114, %v1116
        %v1118 = vrot.slane %v988, 4
        %v1119 = vsel %vm1113, %v1115, %v1118
        %1126 = vst [vmem:[#allocation3] sm:$0xf0] %v1114
        %1127 = vst [vmem:[#allocation3 + $0x8] sm:$0xf0] %v1115
        %1128 = vst [vmem:[#allocation3 + $0x10] sm:$0xff] %v1117
        %1129 = vst [vmem:[#allocation3 + $0x18] sm:$0xff] %v1119
        %1130 = vst [vmem:[#allocation3 + $0x20] sm:$0xf] %v1116
        %1131 = vst [vmem:[#allocation3 + $0x28] sm:$0xf] %v1118
        %1132 = vst [vmem:[#allocation4] sm:$0x1f] 0.0
        %1133 = vst [vmem:[#allocation4 + $0x8] sm:$0x1f] 0.0
        %vm1138 = vcmask 1044480
        %v1139 = vrot.slane %v1074, 3
        %v1140 = vrot.slane %v1075, 3
        %v1141 = vrot.slane %v1076, 3
        %v1142 = vsel %vm1138, %v1139, %v1141
        %v1143 = vrot.slane %v1077, 3
        %v1144 = vsel %vm1138, %v1140, %v1143
        %1151 = vst [vmem:[#allocation4] sm:$0xe0] %v1139
        %1152 = vst [vmem:[#allocation4 + $0x8] sm:$0xe0] %v1140
        %1153 = vst [vmem:[#allocation4 + $0x10] sm:$0xff] %v1142
        %1154 = vst [vmem:[#allocation4 + $0x18] sm:$0xff] %v1144
        %1155 = vst [vmem:[#allocation4 + $0x20] sm:$0x1f] %v1141
        %1156 = vst [vmem:[#allocation4 + $0x28] sm:$0x1f] %v1143
        %v1157 = vld [vmem:[%s10] sm:$0xff]
        %v1158 = vld [vmem:[%s10 + $0x8] sm:$0xff]
        %v1159 = vld [vmem:[%s11] sm:$0xff]
        %v1160 = vld [vmem:[%s11 + $0x8] sm:$0xff]
        %s1161 = scalar_lea.vmem %s634, 4
        %v1162 = vld [vmem:[%s1161] ss:$8 sm:$0x3]
        %v1164 = vlaneseq
        %v1165 = vshrl.u32 %v1164, 7
        %v1166 = vsub.s32 0, %v1165
        %v1167 = vrot.slane %v1162, %v1166
        %v1168 = vlaneseq
        %v1169 = vshrl.u32 %v1168, 7
        %v1170 = vsub.s32 1, %v1169
        %v1171 = vrot.slane %v1162, %v1170
        %v1174 = vmul.f32 %v807, %v1167
        %v1175 = vmul.f32 %v808, %v1171
        %v1176 = vmul.f32 %v809, %v1167
        %v1177 = vmul.f32 %v810, %v1171
        %s1178 = scalar_lea.vmem %s634, 5
        %v1179 = vld [vmem:[%s1178] ss:$8 sm:$0x3]
        %v1181 = vlaneseq
        %v1182 = vshrl.u32 %v1181, 7
        %v1183 = vsub.s32 0, %v1182
        %v1184 = vrot.slane %v1179, %v1183
        %v1185 = vlaneseq
        %v1186 = vshrl.u32 %v1185, 7
        %v1187 = vsub.s32 1, %v1186
        %v1188 = vrot.slane %v1179, %v1187
        %v1191 = vmul.f32 %v896, %v1184
        %v1192 = vmul.f32 %v897, %v1188
        %v1193 = vmul.f32 %v898, %v1184
        %v1194 = vmul.f32 %v899, %v1188
        %v1195 = vadd.f32 %v1174, %v1191
        %v1196 = vadd.f32 %v1175, %v1192
        %v1197 = vadd.f32 %v1176, %v1193
        %v1198 = vadd.f32 %v1177, %v1194
        %s1199 = scalar_lea.vmem %s634, 7
        %v1200 = vld [vmem:[%s1199] ss:$8 sm:$0x3]
        %v1202 = vlaneseq
        %v1203 = vshrl.u32 %v1202, 7
        %v1204 = vsub.s32 0, %v1203
        %v1205 = vrot.slane %v1200, %v1204
        %v1206 = vlaneseq
        %v1207 = vshrl.u32 %v1206, 7
        %v1208 = vsub.s32 1, %v1207
        %v1209 = vrot.slane %v1200, %v1208
        %v1212 = vmul.f32 %v985, %v1205
        %v1213 = vmul.f32 %v986, %v1209
        %v1214 = vmul.f32 %v987, %v1205
        %v1215 = vmul.f32 %v988, %v1209
        %v1216 = vadd.f32 %v1195, %v1212
        %v1217 = vadd.f32 %v1196, %v1213
        %v1218 = vadd.f32 %v1197, %v1214
        %v1219 = vadd.f32 %v1198, %v1215
        %s1220 = scalar_lea.vmem %s634, 16
        %v1221 = vld [vmem:[%s1220] ss:$8 sm:$0x3]
        %v1223 = vlaneseq
        %v1224 = vshrl.u32 %v1223, 7
        %v1225 = vsub.s32 0, %v1224
        %v1226 = vrot.slane %v1221, %v1225
        %v1227 = vlaneseq
        %v1228 = vshrl.u32 %v1227, 7
        %v1229 = vsub.s32 1, %v1228
        %v1230 = vrot.slane %v1221, %v1229
        %v1233 = vmul.f32 %v1074, %v1226
        %v1234 = vmul.f32 %v1075, %v1230
        %v1235 = vmul.f32 %v1076, %v1226
        %v1236 = vmul.f32 %v1077, %v1230
        %v1237 = vadd.f32 %v1216, %v1233
        %v1238 = vadd.f32 %v1217, %v1234
        %v1239 = vadd.f32 %v1218, %v1235
        %v1240 = vadd.f32 %v1219, %v1236
        %v1241 = vld [vmem:[#allocation2] sm:$0xff]
        %v1242 = vld [vmem:[#allocation2 + $0x8] sm:$0xff]
        %v1243 = vld [vmem:[#allocation2 + $0x10] sm:$0xff]
        %v1244 = vld [vmem:[#allocation2 + $0x18] sm:$0xff]
        %s1245 = scalar_lea.vmem %s634, 3
        %v1246 = vld [vmem:[%s1245] ss:$8 sm:$0x3]
        %v1248 = vlaneseq
        %v1249 = vshrl.u32 %v1248, 7
        %v1250 = vsub.s32 0, %v1249
        %v1251 = vrot.slane %v1246, %v1250
        %v1252 = vlaneseq
        %v1253 = vshrl.u32 %v1252, 7
        %v1254 = vsub.s32 1, %v1253
        %v1255 = vrot.slane %v1246, %v1254
        %v1258 = vmul.f32 %v1241, %v1251
        %v1259 = vmul.f32 %v1242, %v1255
        %v1260 = vmul.f32 %v1243, %v1251
        %v1261 = vmul.f32 %v1244, %v1255
        %v1262 = vld [vmem:[#allocation4] sm:$0xf0]
        %v1263 = vld [vmem:[#allocation4 + $0x8] sm:$0xf0]
        %v1264 = vld [vmem:[#allocation4 + $0x10] sm:$0xff]
        %v1265 = vld [vmem:[#allocation4 + $0x18] sm:$0xff]
        %v1266 = vld [vmem:[#allocation4 + $0x20] sm:$0xf]
        %v1267 = vld [vmem:[#allocation4 + $0x28] sm:$0xf]
        %s1268 = scalar_lea.vmem %s634, 6
        %v1269 = vld [vmem:[%s1268] ss:$8 sm:$0x3]
        %v1271 = vlaneseq
        %v1272 = vshrl.u32 %v1271, 7
        %v1273 = vsub.s32 0, %v1272
        %v1274 = vrot.slane %v1269, %v1273
        %v1275 = vlaneseq
        %v1276 = vshrl.u32 %v1275, 7
        %v1277 = vsub.s32 1, %v1276
        %v1278 = vrot.slane %v1269, %v1277
        %v1281 = vmul.f32 %v1262, %v1274
        %v1282 = vmul.f32 %v1263, %v1278
        %v1283 = vmul.f32 %v1264, %v1274
        %v1284 = vmul.f32 %v1265, %v1278
        %v1285 = vmul.f32 %v1266, %v1274
        %v1286 = vmul.f32 %v1267, %v1278
        %v1293 = vrot.slane %v1281, 4
        %v1294 = vrot.slane %v1283, 4
        %v1295 = vsel %vm1113, %v1293, %v1294
        %v1296 = vrot.slane %v1282, 4
        %v1297 = vrot.slane %v1284, 4
        %v1298 = vsel %vm1113, %v1296, %v1297
        %v1299 = vrot.slane %v1285, 4
        %v1300 = vsel %vm1113, %v1294, %v1299
        %v1301 = vrot.slane %v1286, 4
        %v1302 = vsel %vm1113, %v1297, %v1301
        %v1307 = vadd.f32 %v1258, %v1295
        %v1308 = vadd.f32 %v1259, %v1298
        %v1309 = vadd.f32 %v1260, %v1300
        %v1310 = vadd.f32 %v1261, %v1302
        %1312 = vset.pattern.permute.xlu0 0
        %1313 = vperm.xlu0 %1312, %v1157
        %v1314 = vpop.permute.xlu0 %1313
        %1317 = vset.pattern.permute.xlu0 0
        %1318 = vperm.xlu0 %1317, %v1158
        %v1319 = vpop.permute.xlu0 %1318
        %v1321 = vmul.f32 %v1314, %v1307
        %v1322 = vmul.f32 %v1314, %v1308
        %v1323 = vmul.f32 %v1319, %v1309
        %v1324 = vmul.f32 %v1319, %v1310
        %v1325 = vadd.f32 %v1237, %v1321
        %v1326 = vadd.f32 %v1238, %v1322
        %v1327 = vadd.f32 %v1239, %v1323
        %v1328 = vadd.f32 %v1240, %v1324
        %v1329 = vld [vmem:[#allocation3] sm:$0xff]
        %v1330 = vld [vmem:[#allocation3 + $0x8] sm:$0xff]
        %v1331 = vld [vmem:[#allocation3 + $0x10] sm:$0xff]
        %v1332 = vld [vmem:[#allocation3 + $0x18] sm:$0xff]
        %s1333 = scalar_lea.vmem %s634, 1
        %v1334 = vld [vmem:[%s1333] ss:$8 sm:$0x3]
        %v1336 = vlaneseq
        %v1337 = vshrl.u32 %v1336, 7
        %v1338 = vsub.s32 0, %v1337
        %v1339 = vrot.slane %v1334, %v1338
        %v1340 = vlaneseq
        %v1341 = vshrl.u32 %v1340, 7
        %v1342 = vsub.s32 1, %v1341
        %v1343 = vrot.slane %v1334, %v1342
        %v1346 = vmul.f32 %v1329, %v1339
        %v1347 = vmul.f32 %v1330, %v1343
        %v1348 = vmul.f32 %v1331, %v1339
        %v1349 = vmul.f32 %v1332, %v1343
        %v1350 = vld [vmem:[#allocation4] sm:$0xfe]
        %v1351 = vld [vmem:[#allocation4 + $0x8] sm:$0xfe]
        %v1352 = vld [vmem:[#allocation4 + $0x20] sm:$0x1]
        %v1353 = vld [vmem:[#allocation4 + $0x28] sm:$0x1]
        %s1354 = scalar_lea.vmem %s634, 2
        %v1355 = vld [vmem:[%s1354] ss:$8 sm:$0x3]
        %v1357 = vlaneseq
        %v1358 = vshrl.u32 %v1357, 7
        %v1359 = vsub.s32 0, %v1358
        %v1360 = vrot.slane %v1355, %v1359
        %v1361 = vlaneseq
        %v1362 = vshrl.u32 %v1361, 7
        %v1363 = vsub.s32 1, %v1362
        %v1364 = vrot.slane %v1355, %v1363
        %v1367 = vmul.f32 %v1350, %v1360
        %v1368 = vmul.f32 %v1351, %v1364
        %v1369 = vmul.f32 %v1264, %v1360
        %v1370 = vmul.f32 %v1265, %v1364
        %v1371 = vmul.f32 %v1352, %v1360
        %v1372 = vmul.f32 %v1353, %v1364
        %vm1379 = vcmask 1046528
        %v1380 = vrot.slane %v1367, 1
        %v1381 = vrot.slane %v1369, 1
        %v1382 = vsel %vm1379, %v1380, %v1381
        %v1383 = vrot.slane %v1368, 1
        %v1384 = vrot.slane %v1370, 1
        %v1385 = vsel %vm1379, %v1383, %v1384
        %v1386 = vrot.slane %v1371, 1
        %v1387 = vsel %vm1379, %v1381, %v1386
        %v1388 = vrot.slane %v1372, 1
        %v1389 = vsel %vm1379, %v1384, %v1388
        %v1394 = vadd.f32 %v1346, %v1382
        %v1395 = vadd.f32 %v1347, %v1385
        %v1396 = vadd.f32 %v1348, %v1387
        %v1397 = vadd.f32 %v1349, %v1389
        %1399 = vset.pattern.permute.xlu0 0
        %1400 = vperm.xlu0 %1399, %v1159
        %v1401 = vpop.permute.xlu0 %1400
        %1404 = vset.pattern.permute.xlu0 0
        %1405 = vperm.xlu0 %1404, %v1160
        %v1406 = vpop.permute.xlu0 %1405
        %v1408 = vmul.f32 %v1401, %v1394
        %v1409 = vmul.f32 %v1401, %v1395
        %v1410 = vmul.f32 %v1406, %v1396
        %v1411 = vmul.f32 %v1406, %v1397
        %v1412 = vadd.f32 %v1325, %v1408
        %v1413 = vadd.f32 %v1326, %v1409
        %v1414 = vadd.f32 %v1327, %v1410
        %v1415 = vadd.f32 %v1328, %v1411
        %v1416 = vmul.f32 %v1157, %v1159
        %v1417 = vmul.f32 %v1158, %v1160
        %v1418 = vld [vmem:[#allocation4] sm:$0xff]
        %v1419 = vld [vmem:[#allocation4 + $0x8] sm:$0xff]
        %v1420 = vld [vmem:[#allocation4 + $0x10] sm:$0xff]
        %v1421 = vld [vmem:[#allocation4 + $0x18] sm:$0xff]
        %v1422 = vld [vmem:[%s634] ss:$8 sm:$0x3]
        %v1424 = vlaneseq
        %v1425 = vshrl.u32 %v1424, 7
        %v1426 = vsub.s32 0, %v1425
        %v1427 = vrot.slane %v1422, %v1426
        %v1428 = vlaneseq
        %v1429 = vshrl.u32 %v1428, 7
        %v1430 = vsub.s32 1, %v1429
        %v1431 = vrot.slane %v1422, %v1430
        %v1434 = vmul.f32 %v1418, %v1427
        %v1435 = vmul.f32 %v1419, %v1431
        %v1436 = vmul.f32 %v1420, %v1427
        %v1437 = vmul.f32 %v1421, %v1431
        %1439 = vset.pattern.permute.xlu0 0
        %1440 = vperm.xlu0 %1439, %v1416
        %v1441 = vpop.permute.xlu0 %1440
        %1444 = vset.pattern.permute.xlu0 0
        %1445 = vperm.xlu0 %1444, %v1417
        %v1446 = vpop.permute.xlu0 %1445
        %v1448 = vmul.f32 %v1441, %v1434
        %v1449 = vmul.f32 %v1441, %v1435
        %v1450 = vmul.f32 %v1446, %v1436
        %v1451 = vmul.f32 %v1446, %v1437
        %v1452 = vadd.f32 %v1412, %v1448
        %v1453 = vadd.f32 %v1413, %v1449
        %v1454 = vadd.f32 %v1414, %v1450
        %v1455 = vadd.f32 %v1415, %v1451
        %v1456 = vld [vmem:[%s639] sm:$0x3]
        %v1458 = vlaneseq
        %v1459 = vshrl.u32 %v1458, 7
        %v1460 = vsub.s32 0, %v1459
        %v1461 = vrot.slane %v1456, %v1460
        %v1462 = vlaneseq
        %v1463 = vshrl.u32 %v1462, 7
        %v1464 = vsub.s32 1, %v1463
        %v1465 = vrot.slane %v1456, %v1464
        %v1468 = vmul.f32 %v1452, %v1461
        %v1469 = vmul.f32 %v1453, %v1465
        %v1470 = vmul.f32 %v1454, %v1461
        %v1471 = vmul.f32 %v1455, %v1465
        %v1472 = vld [vmem:[%s644] sm:$0x3]
        %v1474 = vlaneseq
        %v1475 = vshrl.u32 %v1474, 7
        %v1476 = vsub.s32 0, %v1475
        %v1477 = vrot.slane %v1472, %v1476
        %v1478 = vlaneseq
        %v1479 = vshrl.u32 %v1478, 7
        %v1480 = vsub.s32 1, %v1479
        %v1481 = vrot.slane %v1472, %v1480
        %v1484 = vadd.f32 %v1468, %v1477
        %v1485 = vadd.f32 %v1469, %v1481
        %v1486 = vadd.f32 %v1470, %v1477
        %v1487 = vadd.f32 %v1471, %v1481
        %v1488 = vxor.u32 %v1484, 2147483648
        %v1489 = vxor.u32 %v1485, 2147483648
        %v1490 = vxor.u32 %v1486, 2147483648
        %v1491 = vxor.u32 %v1487, 2147483648
        %v1492 = vmul.f32 %v1488, 1.442695
        %v1493 = vpow.pop %v1492
        %v1494 = vmul.f32 %v1489, 1.442695
        %v1495 = vpow.pop %v1494
        %v1496 = vmul.f32 %v1490, 1.442695
        %v1497 = vpow.pop %v1496
        %v1498 = vmul.f32 %v1491, 1.442695
        %v1499 = vpow.pop %v1498
        %v1500 = vadd.f32 %v1493, 1.0
        %v1501 = vadd.f32 %v1495, 1.0
        %v1502 = vadd.f32 %v1497, 1.0
        %v1503 = vadd.f32 %v1499, 1.0
        %v1504 = vrcp.pop %v1500
        %v1505 = vmul.f32 1.0, %v1504
        %v1506 = vrcp.pop %v1501
        %v1507 = vmul.f32 1.0, %v1506
        %v1508 = vrcp.pop %v1502
        %v1509 = vmul.f32 1.0, %v1508
        %v1510 = vrcp.pop %v1503
        %v1511 = vmul.f32 1.0, %v1510
        %v1512 = vmul.f32 %v1484, %v1505
        %v1513 = vmul.f32 %v1485, %v1507
        %v1514 = vmul.f32 %v1486, %v1509
        %v1515 = vmul.f32 %v1487, %v1511
        %v1516 = vpack.c.bf16 %v1514, %v1512
        %v1517 = vpack.c.bf16 %v1515, %v1513
        %v1520 = vunpack.c.l.b16 %v1516
        %v1521 = vunpack.c.l.b16 %v1517
        %v1522 = vunpack.c.h.b16 %v1516
        %v1523 = vunpack.c.h.b16 %v1517
        %v1524 = vpack.c.b16 %v1521, %v1520
        %v1525 = vpack.c.b16 %v1523, %v1522
        %1528 = vst [vmem:[%s586] sm:$0xff] %v1524
        %1529 = vst [vmem:[%s586 + $0x8] sm:$0xff] %v1525
        %v1530 = vadd.f32 %v1512, %v1514
        %v1531 = vrot.slane %v1530, 4
        %v1532 = vadd.f32 %v1530, %v1531
        %v1533 = vrot.slane %v1532, 2
        %v1534 = vadd.f32 %v1532, %v1533
        %v1535 = vrot.slane %v1534, 1
        %v1536 = vadd.f32 %v1534, %v1535
        %v1537 = vadd.f32 %v1513, %v1515
        %v1538 = vrot.slane %v1537, 4
        %v1539 = vadd.f32 %v1537, %v1538
        %v1540 = vrot.slane %v1539, 2
        %v1541 = vadd.f32 %v1539, %v1540
        %v1542 = vrot.slane %v1541, 1
        %v1543 = vadd.f32 %v1541, %v1542
        %1544 = vst [vmem:[%s593] sm:$0xff] %v1536
        %1545 = vst [vmem:[%s593 + $0x8] sm:$0xff] %v1543
        %s1546 = sand.u32 %s355, 1
        %s1547 = scalar_lea.sflag [#allocation6], %s1546
        %s1548 = sand.u32 %s355, 1
        %s1549 = smul.addr %s1548, 16
        %s1550 = scalar_lea.vmem [#allocation5], %s1549
        %s1551 = sand.u32 %s383, 1
        %s1552 = scalar_lea.sflag [#allocation8], %s1551
        %s1553 = sand.u32 %s383, 1
        %s1554 = smul.addr %s1553, 16
        %s1555 = scalar_lea.vmem [#allocation7], %s1554
        // Predicated region
        $region69: #{fused_expand_dw_s2.1} parent=67 // pred_check
          %p1556 = pneg %p365
        $region70: #{fused_expand_dw_s2.1} parent=67 // pred_check_branch
          %1558 = sbr.rel (%p1556) target = $region72
        $region71: #{fused_expand_dw_s2.1} parent=67 // pred_region
          %s1559 = smul.u32 2, %s36
          %s1561 = ssub.s32 256, 256
          %1562 = vsyncadd %s1547, %s1561
          %s1563 = smul.addr %s35, 4
          %s1564 = sadd.s32 %s1559, %s1563
          %s1565 = smul.addr %s1564, 64
          %s1566 = scalar_lea.hbm %s12, %s1565
          %s1567 = sshll.u32 %s1550, 4
          %s1568 = int_to_ptr.vmem [resolvable:$true] %s1567
          %1573 = dma.vmem_to_hbm [thread:$0]  %s1568, 256, %s1566, %s1547, 128, 128, 8
        $region72: #{fused_expand_dw_s2.1} parent=67 // pred_fallthru
          _
        // Predicated region
        $region73: #{fused_expand_dw_s2.1} parent=67 // pred_check
          %p1574 = pneg %p393
        $region74: #{fused_expand_dw_s2.1} parent=67 // pred_check_branch
          %1576 = sbr.rel (%p1574) target = $region76
        $region75: #{fused_expand_dw_s2.1} parent=67 // pred_region
          %s1577 = smul.u32 2, %s36
          %s1579 = ssub.s32 256, 256
          %1580 = vsyncadd %s1552, %s1579
          %s1581 = smul.addr %s35, 2
          %s1582 = sadd.s32 %s1577, %s1581
          %s1583 = smul.addr %s1582, 128
          %s1584 = scalar_lea.hbm %s13, %s1583
          %s1586 = sshll.u32 %s1555, 4
          %s1587 = int_to_ptr.vmem [resolvable:$true] %s1586
          %1589 = dma.vmem_to_hbm [thread:$0]  %s1587, 256, %s1584, %s1552
        $region76: #{fused_expand_dw_s2.1} parent=67 // pred_fallthru
          _
      $region68: #{fused_expand_dw_s2.1} parent=5 // pred_fallthru
        _
      %p1590 = scmp.le.s32.totalorder 2, %s26
      // Predicated region
      $region77: #{fused_expand_dw_s2.1} parent=5 // pred_check
        %p1591 = pneg %p1590
      $region78: #{fused_expand_dw_s2.1} parent=5 // pred_check_branch
        %1593 = sbr.rel (%p1591) target = $region80
      $region79: #{fused_expand_dw_s2.1} parent=5 // pred_region
        %s1594 = ssub.s32 %s26, 2
        // Predicated region
        $region81: #{fused_expand_dw_s2.1} parent=79 // pred_check
          %p1595 = pneg %p371
        $region82: #{fused_expand_dw_s2.1} parent=79 // pred_check_branch
          %1597 = sbr.rel (%p1595) target = $region84
        $region83: #{fused_expand_dw_s2.1} parent=79 // pred_region
          %s1598 = sand.u32 %s356, 1
          %s1599 = scalar_lea.sflag [#allocation6], %s1598
          %s1600 = sand.u32 %s356, 1
          %s1601 = smul.addr %s1600, 16
          %s1602 = scalar_lea.vmem [#allocation5], %s1601
          %1603 = dma.done %s1599, 256
        $region84: #{fused_expand_dw_s2.1} parent=79 // pred_fallthru
          _
        // Predicated region
        $region85: #{fused_expand_dw_s2.1} parent=79 // pred_check
          %p1604 = pneg %p399
        $region86: #{fused_expand_dw_s2.1} parent=79 // pred_check_branch
          %1606 = sbr.rel (%p1604) target = $region88
        $region87: #{fused_expand_dw_s2.1} parent=79 // pred_region
          %s1607 = sand.u32 %s384, 1
          %s1608 = scalar_lea.sflag [#allocation8], %s1607
          %s1609 = sand.u32 %s384, 1
          %s1610 = smul.addr %s1609, 16
          %s1611 = scalar_lea.vmem [#allocation7], %s1610
          %1612 = dma.done %s1608, 256
        $region88: #{fused_expand_dw_s2.1} parent=79 // pred_fallthru
          _
      $region80: #{fused_expand_dw_s2.1} parent=5 // pred_fallthru
        _
    $region6: #{fused_expand_dw_s2.1} parent=1 // loop_footer
      %s30 = sadd.s32 1, %s26
    $region7: #{fused_expand_dw_s2.1} parent=1 // loop_footer_branch
      %25 = sbr.rel target = $region3
    $region8: #{fused_expand_dw_s2.1} parent=1 // loop_exit
      _
    %1613 = vsyncpa [#allocation6], 1
    %s1614 = scalar_lea.sflag [#allocation6], 1
    %1615 = vsyncpa %s1614, 1
    %1616 = vsyncpa [#allocation8], 1
    %s1617 = scalar_lea.sflag [#allocation8], 1
    %1618 = vsyncpa %s1617, 1

</llo_original>
